<compile_context>
chip_gen: v7x
topology: tpu7x:2x2x1
jax: 0.10.0
libtpu: 0.0.40
codegen_flags: <defaults>
</compile_context>

<pallas_src>
import jax
import jax.numpy as jnp
from jax import lax
from jax.experimental import pallas as pl
from jax.experimental.pallas import tpu as pltpu

BN_EPS = 1e-5
LANE = 128       # TODO(synk): 256-wide tiles on v6e/v7x once real feature dims exceed 128
SUBLANE = 8


def _round_up(n, m):
    return ((n + m - 1) // m) * m


def _pad2(x, rows, cols, dtype=jnp.float32):
    out = jnp.zeros((rows, cols), jnp.float32)
    out = out.at[:x.shape[0], :x.shape[1]].set(x)
    return out.astype(dtype)


# --------------------------------------------------------------------------
# Fused forward kernel (single block, whole graph resident in VMEM)
#   operands: a_hat_pad (bf16), x_pad (bf16), seg_scaled (bf16),
#             wstack (bf16, n_layers x W x 2W), hstack (bf16, 3 x W x W),
#             vecs (f32, R_pad x 2W)
#   outputs : seg_out (segment means, f32), head_out (projection head, f32)
# --------------------------------------------------------------------------
def make_fused_kernel(n_layers, width, n_real, n_pad):
    inv_n = 1.0 / float(n_real)

    def kernel(a_ref, x_ref, seg_ref, wl_ref, hw_ref, vec_ref,
               seg_out_ref, head_out_ref):
        a = a_ref[...]                                   # (N_pad, N_pad) bf16
        h = x_ref[...].astype(jnp.float32)               # (N_pad, W) f32 working copy
        vecs = vec_ref[...]                              # (R_pad, 2W) f32 small vectors

        # mask of real node rows: padded rows must not pollute BN batch stats
        row_ids = lax.broadcasted_iota(jnp.int32, (n_pad, width), 0)
        mask = (row_ids < n_real).astype(jnp.float32)    # (N_pad, W)

        for i in range(n_layers):
            # one wide MXU pass for both the conv and residual projections: X @ [W | Wr]
            z = jnp.dot(h.astype(jnp.bfloat16), wl_ref[i],
                        preferred_element_type=jnp.float32)          # (N_pad, 2W)
            xw = z[:, :width]                                        # lane-aligned split
            xr = z[:, width:]
            bcat = vecs[3 * i:3 * i + 1, :]                          # (1, 2W)
            gamma = vecs[3 * i + 1:3 * i + 2, :width]                # (1, W)
            beta = vecs[3 * i + 2:3 * i + 3, :width]                 # (1, W)

            conv = jnp.maximum(
                jnp.dot(a, xw.astype(jnp.bfloat16),
                        preferred_element_type=jnp.float32) + bcat[:, :width], 0.0)
            res = jnp.maximum(xr + bcat[:, width:], 0.0)
            h = conv + res
            # TODO(synk): nn.Dropout (gcn_dropout) omitted — deterministic forward pass.

            # BatchNorm1d, training-mode biased batch statistics over the real rows,
            # folded to h * scale + shift (f32 VPU math).
            hm = h * mask
            mean = jnp.sum(hm, axis=0, keepdims=True) * inv_n
            diff = (hm - mean) * mask
            var = jnp.sum(diff * diff, axis=0, keepdims=True) * inv_n
            scale = gamma * lax.rsqrt(var + BN_EPS)
            shift = beta - mean * scale
            # padded node rows become `shift` here but never leak: their a_hat / seg
            # columns are zero and stats are masked next layer.
            h = h * scale + shift

        # fused AvgPooling readout + scatter_mean (seg rows pre-scaled by 1/count)
        seg_means = jnp.dot(seg_ref[...], h.astype(jnp.bfloat16),
                            preferred_element_type=jnp.float32)      # (S_pad, W)
        seg_out_ref[...] = seg_means

        # fused projection head (feat_lin + out_lin) for graph rows and motif rows
        r0 = 3 * n_layers
        b1 = vecs[r0:r0 + 1, :width]
        b2 = vecs[r0 + 1:r0 + 2, :width]
        b3 = vecs[r0 + 2:r0 + 3, :width]
        hh = jnp.dot(seg_means.astype(jnp.bfloat16), hw_ref[0],
                     preferred_element_type=jnp.float32) + b1
        hh = jnp.maximum(
            jnp.dot(hh.astype(jnp.bfloat16), hw_ref[1],
                    preferred_element_type=jnp.float32) + b2, 0.0)
        head_out_ref[...] = jnp.dot(hh.astype(jnp.bfloat16), hw_ref[2],
                                    preferred_element_type=jnp.float32) + b3

    return kernel


# --------------------------------------------------------------------------
# Parameter init (deterministic, shapes as in the PyTorch module __init__)
# --------------------------------------------------------------------------
def init_params(key, gcn_hidden_feats, ffn_hidden_feats):
    params = {'layers': []}
    in_f = gcn_hidden_feats[0]
    keys = jax.random.split(key, len(gcn_hidden_feats) + 1)
    for i, out_f in enumerate(gcn_hidden_feats):
        k = jax.random.split(keys[i], 2)
        params['layers'].append(dict(
            w=(jax.random.normal(k[0], (in_f, out_f)) * 0.1).astype(jnp.float32),
            b=jnp.zeros((1, out_f), jnp.float32),
            wr=(jax.random.normal(k[1], (in_f, out_f)) * 0.1).astype(jnp.float32),
            br=jnp.zeros((1, out_f), jnp.float32),
            gamma=jnp.ones((1, out_f), jnp.float32),
            beta=jnp.zeros((1, out_f), jnp.float32),
        ))
        in_f = out_f
    gnn_out = gcn_hidden_feats[-1]
    kf = jax.random.split(keys[-1], 3)
    params['head'] = dict(
        w1=(jax.random.normal(kf[0], (gnn_out, ffn_hidden_feats)) * 0.1).astype(jnp.float32),
        b1=jnp.zeros((1, ffn_hidden_feats), jnp.float32),
        w2=(jax.random.normal(kf[1], (ffn_hidden_feats, ffn_hidden_feats)) * 0.1).astype(jnp.float32),
        b2=jnp.zeros((1, ffn_hidden_feats), jnp.float32),
        w3=(jax.random.normal(kf[2], (ffn_hidden_feats, ffn_hidden_feats // 2)) * 0.1).astype(jnp.float32),
        b3=jnp.zeros((1, ffn_hidden_feats // 2), jnp.float32),
    )
    return params


# --------------------------------------------------------------------------
# One-time packing (hoisted out of the per-call hot path)
# --------------------------------------------------------------------------
def pack_inputs(params, a_hat, node_feats, graph_onehot, motif_onehot):
    n_layers = len(params['layers'])
    N, f_in = node_feats.shape
    G = graph_onehot.shape[0]
    M = motif_onehot.shape[0]
    f_last = params['layers'][-1]['w'].shape[1]
    ffn = params['head']['w1'].shape[1]
    out_dim = params['head']['w3'].shape[1]

    dims = [f_in] + [lp['w'].shape[1] for lp in params['layers']] + [ffn, out_dim]
    W = _round_up(max(dims), LANE)          # single global lane-padded feature width
    N_pad = _round_up(N, LANE)              # lane-dense contraction dim for a@xw / seg@h

    x_pad = _pad2(node_feats, N_pad, W, jnp.bfloat16)
    a_pad = _pad2(a_hat, N_pad, N_pad, jnp.bfloat16)

    # fused segment-mean matrix: graph readout rows + motif rows (motif 0 dropped),
    # rows pre-scaled by 1/max(count,1) so the kernel needs only one matmul
    seg = jnp.concatenate([graph_onehot, motif_onehot[1:]], axis=0)
    S = seg.shape[0]
    S_pad = _round_up(S, SUBLANE)
    counts = jnp.sum(seg, axis=1, keepdims=True)
    seg_scaled = _pad2(seg / jnp.maximum(counts, 1.0), S_pad, N_pad, jnp.bfloat16)

    # stacked layer weights (n_layers, W, 2W): conv W in [:, :fo], residual Wr in [:, W:W+fo]
    wl, vec_rows = [], []
    for lp in params['layers']:
        fi, fo = lp['w'].shape
        wcat = jnp.zeros((W, 2 * W), jnp.float32)
        wcat = wcat.at[:fi, :fo].set(lp['w']).at[:fi, W:W + fo].set(lp['wr'])
        wl.append(wcat)
        bcat = jnp.zeros((1, 2 * W), jnp.float32)
        bcat = bcat.at[:, :fo].set(lp['b']).at[:, W:W + fo].set(lp['br'])
        vec_rows += [bcat, _pad2(lp['gamma'], 1, 2 * W), _pad2(lp['beta'], 1, 2 * W)]
    wstack = jnp.stack(wl).astype(jnp.bfloat16)

    hp = params['head']
    hw = jnp.zeros((3, W, W), jnp.float32)
    hw = hw.at[0, :f_last, :ffn].set(hp['w1'])
    hw = hw.at[1, :ffn, :ffn].set(hp['w2'])
    hw = hw.at[2, :ffn, :out_dim].set(hp['w3'])
    hstack = hw.astype(jnp.bfloat16)
    vec_rows += [_pad2(hp['b1'], 1, 2 * W), _pad2(hp['b2'], 1, 2 * W),
                 _pad2(hp['b3'], 1, 2 * W)]

    R = len(vec_rows)
    R_pad = _round_up(R, SUBLANE)
    vecs = jnp.concatenate(vec_rows + [jnp.zeros((R_pad - R, 2 * W), jnp.float32)], axis=0)

    arrays = dict(a=a_pad, x=x_pad, seg=seg_scaled, wstack=wstack, hstack=hstack, vecs=vecs)
    meta = dict(n_layers=n_layers, W=W, N=N, N_pad=N_pad, S_pad=S_pad,
                G=G, M=M, f_last=f_last, out_dim=out_dim)
    return arrays, meta


# --------------------------------------------------------------------------
# Forward builder: returns a jitted function whose hot path is one pallas_call
# --------------------------------------------------------------------------
def build_forward(meta):
    n_layers, W = meta['n_layers'], meta['W']
    N, N_pad, S_pad = meta['N'], meta['N_pad'], meta['S_pad']
    G, M = meta['G'], meta['M']
    f_last, out_dim = meta['f_last'], meta['out_dim']

    call = pl.pallas_call(
        make_fused_kernel(n_layers, W, N, N_pad),
        out_shape=(jax.ShapeDtypeStruct((S_pad, W), jnp.float32),
                   jax.ShapeDtypeStruct((S_pad, W), jnp.float32)),
        in_specs=[pl.BlockSpec(memory_space=pltpu.MemorySpace.VMEM)] * 6,
        out_specs=(pl.BlockSpec(memory_space=pltpu.MemorySpace.VMEM),
                   pl.BlockSpec(memory_space=pltpu.MemorySpace.VMEM)),
        compiler_params=pltpu.CompilerParams(vmem_limit_bytes=48 * 1024 * 1024),
    )

    @jax.jit
    def fwd(a, x, seg, wstack, hstack, vecs):
        seg_out, head_out = call(a, x, seg, wstack, hstack, vecs)
        graph_feats = seg_out[:G, :f_last]
        out_global = head_out[:G, :out_dim]
        out_sub = head_out[G:G + (M - 1), :out_dim]
        return graph_feats, out_global, out_sub

    return fwd


# --------------------------------------------------------------------------
# Pure-JAX f32 reference (for correctness check)
# --------------------------------------------------------------------------
def gcn_forward_ref(params, a_hat, node_feats, graph_onehot, motif_onehot):
    h = node_feats
    for lp in params['layers']:
        conv = jnp.maximum(a_hat @ (h @ lp['w']) + lp['b'], 0.0)
        res = jnp.maximum(h @ lp['wr'] + lp['br'], 0.0)
        z = conv + res
        mu = jnp.mean(z, axis=0, keepdims=True)
        var = jnp.mean((z - mu) ** 2, axis=0, keepdims=True)
        h = (z - mu) / jnp.sqrt(var + BN_EPS) * lp['gamma'] + lp['beta']

    def seg_mean(m, x):
        return (m @ x) / jnp.maximum(jnp.sum(m, axis=1, keepdims=True), 1.0)

    def mlp(x, p):
        y = x @ p['w1'] + p['b1']
        y = jnp.maximum(y @ p['w2'] + p['b2'], 0.0)
        return y @ p['w3'] + p['b3']

    gf = seg_mean(graph_onehot, h)
    return gf, mlp(gf, params['head']), mlp(seg_mean(motif_onehot, h)[1:], params['head'])


if __name__ == "__main__":
    key = jax.random.PRNGKey(0)
    k_graph, k_feat, k_motif, k_param = jax.random.split(key, 4)

    # small problem: 32 nodes across 3 graphs, node feature dim = gcn_hidden[0]
    N = 32
    gcn_hidden_feats = [32, 32]
    ffn_hidden_feats = 64
    num_graphs = 3
    num_motifs = 6

    graph_batch = jnp.concatenate([
        jnp.full((11,), 0, jnp.int32),
        jnp.full((11,), 1, jnp.int32),
        jnp.full((10,), 2, jnp.int32),
    ])
    motif_batch = jax.random.randint(k_motif, (N,), 0, num_motifs).astype(jnp.int32)

    # random symmetric block-diagonal adjacency with self-loops (no zero-degree nodes)
    a_rand = (jax.random.uniform(k_graph, (N, N)) < 0.3).astype(jnp.float32)
    a = jnp.clip(a_rand + a_rand.T, 0.0, 1.0)
    same_graph = (graph_batch[:, None] == graph_batch[None, :]).astype(jnp.float32)
    a = a * same_graph + jnp.eye(N, dtype=jnp.float32)
    a = jnp.clip(a, 0.0, 1.0)
    deg = jnp.sum(a, axis=1)
    d_inv_sqrt = 1.0 / jnp.sqrt(deg)
    a_hat = (a * d_inv_sqrt[:, None]) * d_inv_sqrt[None, :]   # D^-1/2 A D^-1/2

    node_feats = jax.random.normal(k_feat, (N, gcn_hidden_feats[0]), jnp.float32)

    graph_onehot = (graph_batch[None, :] == jnp.arange(num_graphs)[:, None]).astype(jnp.float32)
    motif_onehot = (motif_batch[None, :] == jnp.arange(num_motifs)[:, None]).astype(jnp.float32)

    params = init_params(k_param, gcn_hidden_feats, ffn_hidden_feats)

    # pack once (cold path), then the jitted hot path is just the fused kernel
    arrays, meta = pack_inputs(params, a_hat, node_feats, graph_onehot, motif_onehot)
    arrays = jax.device_put(arrays)
    fwd = build_forward(meta)

    graph_feats, out_global, out_sub = fwd(
        arrays['a'], arrays['x'], arrays['seg'],
        arrays['wstack'], arrays['hstack'], arrays['vecs'])
    jax.block_until_ready((graph_feats, out_global, out_sub))

    # correctness check against pure-JAX f32 reference (bf16 MXU -> loosened tolerance)
    gf_r, og_r, os_r = gcn_forward_ref(params, a_hat, node_feats, graph_onehot, motif_onehot)
    assert graph_feats.shape == (num_graphs, gcn_hidden_feats[-1])
    assert out_global.shape == (num_graphs, ffn_hidden_feats // 2)
    assert out_sub.shape == (num_motifs - 1, ffn_hidden_feats // 2)
    assert jnp.allclose(graph_feats, gf_r, atol=5e-2, rtol=5e-2)
    assert jnp.allclose(out_global, og_r, atol=5e-2, rtol=5e-2)
    assert jnp.allclose(out_sub, os_r, atol=5e-2, rtol=5e-2)

    print("KERNEL_OK")
</pallas_src>

<mosaic_0001>
module attributes {stable_mosaic.version = 11 : i64} {
  func.func @kernel(%arg0: memref<128x128xbf16, #tpu.memory_space<vmem>>, %arg1: memref<128x128xbf16, #tpu.memory_space<vmem>>, %arg2: memref<8x128xbf16, #tpu.memory_space<vmem>>, %arg3: memref<2x128x256xbf16, #tpu.memory_space<vmem>>, %arg4: memref<3x128x128xbf16, #tpu.memory_space<vmem>>, %arg5: memref<16x256xf32, #tpu.memory_space<vmem>>, %arg6: memref<8x128xf32, #tpu.memory_space<vmem>>, %arg7: memref<8x128xf32, #tpu.memory_space<vmem>>) attributes {dimension_semantics = [], scalar_prefetch = 0 : i64, scratch_operands = 0 : i64, tpu.core_type = #tpu.core_type<tc>} {
    %c0 = arith.constant 0 : index
    %c0_0 = arith.constant 0 : index
    %0 = vector.load %arg0[%c0, %c0_0] : memref<128x128xbf16, #tpu.memory_space<vmem>>, vector<128x128xbf16>
    %c0_1 = arith.constant 0 : index
    %c0_2 = arith.constant 0 : index
    %1 = vector.load %arg1[%c0_1, %c0_2] : memref<128x128xbf16, #tpu.memory_space<vmem>>, vector<128x128xbf16>
    %2 = arith.extf %1 : vector<128x128xbf16> to vector<128x128xf32>
    %c0_3 = arith.constant 0 : index
    %c0_4 = arith.constant 0 : index
    %3 = vector.load %arg5[%c0_3, %c0_4] : memref<16x256xf32, #tpu.memory_space<vmem>>, vector<16x256xf32>
    %4 = tpu.iota {dimensions = array<i32: 0>} : vector<128x128xi32>
    %c32_i32 = arith.constant 32 : i32
    %5 = vector.broadcast %c32_i32 : i32 to vector<128x128xi32>
    %6 = arith.cmpi slt, %4, %5 : vector<128x128xi32>
    %7 = arith.extui %6 : vector<128x128xi1> to vector<128x128xi32>
    %8 = arith.sitofp %7 : vector<128x128xi32> to vector<128x128xf32>
    %9 = arith.truncf %2 : vector<128x128xf32> to vector<128x128xbf16>
    %c0_5 = arith.constant 0 : index
    %c0_6 = arith.constant 0 : index
    %c0_7 = arith.constant 0 : index
    %10 = vector.load %arg3[%c0_5, %c0_6, %c0_7] : memref<2x128x256xbf16, #tpu.memory_space<vmem>>, vector<1x128x256xbf16>
    %11 = vector.shape_cast %10 : vector<1x128x256xbf16> to vector<128x256xbf16>
    %cst = arith.constant dense<0.000000e+00> : vector<128x256xf32>
    %12 = tpu.matmul %9, %11, %cst {dimension_numbers = #tpu.dot_dimension_numbers<[1], [0], [0], [1], [0, 0, 1, 1], [], []>} : vector<128x128xbf16>, vector<128x256xbf16>, vector<128x256xf32> -> vector<128x256xf32>
    %13 = vector.extract_strided_slice %12 {offsets = [0, 0], sizes = [128, 128], strides = [1, 1]} : vector<128x256xf32> to vector<128x128xf32>
    %14 = vector.extract_strided_slice %12 {offsets = [0, 128], sizes = [128, 128], strides = [1, 1]} : vector<128x256xf32> to vector<128x128xf32>
    %15 = vector.extract_strided_slice %3 {offsets = [0, 0], sizes = [1, 256], strides = [1, 1]} : vector<16x256xf32> to vector<1x256xf32>
    %16 = vector.extract_strided_slice %3 {offsets = [1, 0], sizes = [1, 128], strides = [1, 1]} : vector<16x256xf32> to vector<1x128xf32>
    %17 = vector.extract_strided_slice %3 {offsets = [2, 0], sizes = [1, 128], strides = [1, 1]} : vector<16x256xf32> to vector<1x128xf32>
    %18 = arith.truncf %13 : vector<128x128xf32> to vector<128x128xbf16>
    %cst_8 = arith.constant dense<0.000000e+00> : vector<128x128xf32>
    %19 = tpu.matmul %0, %18, %cst_8 {dimension_numbers = #tpu.dot_dimension_numbers<[1], [0], [0], [1], [0, 0, 1, 1], [], []>} : vector<128x128xbf16>, vector<128x128xbf16>, vector<128x128xf32> -> vector<128x128xf32>
    %20 = vector.extract_strided_slice %15 {offsets = [0, 0], sizes = [1, 128], strides = [1, 1]} : vector<1x256xf32> to vector<1x128xf32>
    %21 = vector.broadcast %20 : vector<1x128xf32> to vector<128x128xf32>
    %22 = arith.addf %19, %21 : vector<128x128xf32>
    %cst_9 = arith.constant 0.000000e+00 : f32
    %23 = vector.broadcast %cst_9 : f32 to vector<128x128xf32>
    %24 = arith.maximumf %22, %23 : vector<128x128xf32>
    %25 = vector.extract_strided_slice %15 {offsets = [0, 128], sizes = [1, 128], strides = [1, 1]} : vector<1x256xf32> to vector<1x128xf32>
    %26 = vector.broadcast %25 : vector<1x128xf32> to vector<128x128xf32>
    %27 = arith.addf %14, %26 : vector<128x128xf32>
    %cst_10 = arith.constant 0.000000e+00 : f32
    %28 = vector.broadcast %cst_10 : f32 to vector<128x128xf32>
    %29 = arith.maximumf %27, %28 : vector<128x128xf32>
    %30 = arith.addf %24, %29 : vector<128x128xf32>
    %31 = arith.mulf %30, %8 : vector<128x128xf32>
    %cst_11 = arith.constant dense<0.000000e+00> : vector<128xf32>
    %32 = vector.multi_reduction <add>, %31, %cst_11 [0] : vector<128x128xf32> to vector<128xf32>
    %33 = vector.shape_cast %32 : vector<128xf32> to vector<1x128xf32>
    %cst_12 = arith.constant 3.125000e-02 : f32
    %34 = vector.broadcast %cst_12 : f32 to vector<1x128xf32>
    %35 = arith.mulf %33, %34 : vector<1x128xf32>
    %36 = vector.broadcast %35 : vector<1x128xf32> to vector<128x128xf32>
    %37 = arith.subf %31, %36 : vector<128x128xf32>
    %38 = arith.mulf %37, %8 : vector<128x128xf32>
    %39 = arith.mulf %38, %38 : vector<128x128xf32>
    %cst_13 = arith.constant dense<0.000000e+00> : vector<128xf32>
    %40 = vector.multi_reduction <add>, %39, %cst_13 [0] : vector<128x128xf32> to vector<128xf32>
    %41 = vector.shape_cast %40 : vector<128xf32> to vector<1x128xf32>
    %cst_14 = arith.constant 3.125000e-02 : f32
    %42 = vector.broadcast %cst_14 : f32 to vector<1x128xf32>
    %43 = arith.mulf %41, %42 : vector<1x128xf32>
    %cst_15 = arith.constant 9.99999974E-6 : f32
    %44 = vector.broadcast %cst_15 : f32 to vector<1x128xf32>
    %45 = arith.addf %43, %44 : vector<1x128xf32>
    %46 = math.rsqrt %45 : vector<1x128xf32>
    %47 = arith.mulf %16, %46 : vector<1x128xf32>
    %48 = arith.mulf %35, %47 : vector<1x128xf32>
    %49 = arith.subf %17, %48 : vector<1x128xf32>
    %50 = vector.broadcast %47 : vector<1x128xf32> to vector<128x128xf32>
    %51 = arith.mulf %30, %50 : vector<128x128xf32>
    %52 = vector.broadcast %49 : vector<1x128xf32> to vector<128x128xf32>
    %53 = arith.addf %51, %52 : vector<128x128xf32>
    %54 = arith.truncf %53 : vector<128x128xf32> to vector<128x128xbf16>
    %c1 = arith.constant 1 : index
    %c0_16 = arith.constant 0 : index
    %c0_17 = arith.constant 0 : index
    %55 = vector.load %arg3[%c1, %c0_16, %c0_17] : memref<2x128x256xbf16, #tpu.memory_space<vmem>>, vector<1x128x256xbf16>
    %56 = vector.shape_cast %55 : vector<1x128x256xbf16> to vector<128x256xbf16>
    %cst_18 = arith.constant dense<0.000000e+00> : vector<128x256xf32>
    %57 = tpu.matmul %54, %56, %cst_18 {dimension_numbers = #tpu.dot_dimension_numbers<[1], [0], [0], [1], [0, 0, 1, 1], [], []>} : vector<128x128xbf16>, vector<128x256xbf16>, vector<128x256xf32> -> vector<128x256xf32>
    %58 = vector.extract_strided_slice %57 {offsets = [0, 0], sizes = [128, 128], strides = [1, 1]} : vector<128x256xf32> to vector<128x128xf32>
    %59 = vector.extract_strided_slice %57 {offsets = [0, 128], sizes = [128, 128], strides = [1, 1]} : vector<128x256xf32> to vector<128x128xf32>
    %60 = vector.extract_strided_slice %3 {offsets = [3, 0], sizes = [1, 256], strides = [1, 1]} : vector<16x256xf32> to vector<1x256xf32>
    %61 = vector.extract_strided_slice %3 {offsets = [4, 0], sizes = [1, 128], strides = [1, 1]} : vector<16x256xf32> to vector<1x128xf32>
    %62 = vector.extract_strided_slice %3 {offsets = [5, 0], sizes = [1, 128], strides = [1, 1]} : vector<16x256xf32> to vector<1x128xf32>
    %63 = arith.truncf %58 : vector<128x128xf32> to vector<128x128xbf16>
    %cst_19 = arith.constant dense<0.000000e+00> : vector<128x128xf32>
    %64 = tpu.matmul %0, %63, %cst_19 {dimension_numbers = #tpu.dot_dimension_numbers<[1], [0], [0], [1], [0, 0, 1, 1], [], []>} : vector<128x128xbf16>, vector<128x128xbf16>, vector<128x128xf32> -> vector<128x128xf32>
    %65 = vector.extract_strided_slice %60 {offsets = [0, 0], sizes = [1, 128], strides = [1, 1]} : vector<1x256xf32> to vector<1x128xf32>
    %66 = vector.broadcast %65 : vector<1x128xf32> to vector<128x128xf32>
    %67 = arith.addf %64, %66 : vector<128x128xf32>
    %cst_20 = arith.constant 0.000000e+00 : f32
    %68 = vector.broadcast %cst_20 : f32 to vector<128x128xf32>
    %69 = arith.maximumf %67, %68 : vector<128x128xf32>
    %70 = vector.extract_strided_slice %60 {offsets = [0, 128], sizes = [1, 128], strides = [1, 1]} : vector<1x256xf32> to vector<1x128xf32>
    %71 = vector.broadcast %70 : vector<1x128xf32> to vector<128x128xf32>
    %72 = arith.addf %59, %71 : vector<128x128xf32>
    %cst_21 = arith.constant 0.000000e+00 : f32
    %73 = vector.broadcast %cst_21 : f32 to vector<128x128xf32>
    %74 = arith.maximumf %72, %73 : vector<128x128xf32>
    %75 = arith.addf %69, %74 : vector<128x128xf32>
    %76 = arith.mulf %75, %8 : vector<128x128xf32>
    %cst_22 = arith.constant dense<0.000000e+00> : vector<128xf32>
    %77 = vector.multi_reduction <add>, %76, %cst_22 [0] : vector<128x128xf32> to vector<128xf32>
    %78 = vector.shape_cast %77 : vector<128xf32> to vector<1x128xf32>
    %cst_23 = arith.constant 3.125000e-02 : f32
    %79 = vector.broadcast %cst_23 : f32 to vector<1x128xf32>
    %80 = arith.mulf %78, %79 : vector<1x128xf32>
    %81 = vector.broadcast %80 : vector<1x128xf32> to vector<128x128xf32>
    %82 = arith.subf %76, %81 : vector<128x128xf32>
    %83 = arith.mulf %82, %8 : vector<128x128xf32>
    %84 = arith.mulf %83, %83 : vector<128x128xf32>
    %cst_24 = arith.constant dense<0.000000e+00> : vector<128xf32>
    %85 = vector.multi_reduction <add>, %84, %cst_24 [0] : vector<128x128xf32> to vector<128xf32>
    %86 = vector.shape_cast %85 : vector<128xf32> to vector<1x128xf32>
    %cst_25 = arith.constant 3.125000e-02 : f32
    %87 = vector.broadcast %cst_25 : f32 to vector<1x128xf32>
    %88 = arith.mulf %86, %87 : vector<1x128xf32>
    %cst_26 = arith.constant 9.99999974E-6 : f32
    %89 = vector.broadcast %cst_26 : f32 to vector<1x128xf32>
    %90 = arith.addf %88, %89 : vector<1x128xf32>
    %91 = math.rsqrt %90 : vector<1x128xf32>
    %92 = arith.mulf %61, %91 : vector<1x128xf32>
    %93 = arith.mulf %80, %92 : vector<1x128xf32>
    %94 = arith.subf %62, %93 : vector<1x128xf32>
    %95 = vector.broadcast %92 : vector<1x128xf32> to vector<128x128xf32>
    %96 = arith.mulf %75, %95 : vector<128x128xf32>
    %97 = vector.broadcast %94 : vector<1x128xf32> to vector<128x128xf32>
    %98 = arith.addf %96, %97 : vector<128x128xf32>
    %c0_27 = arith.constant 0 : index
    %c0_28 = arith.constant 0 : index
    %99 = vector.load %arg2[%c0_27, %c0_28] : memref<8x128xbf16, #tpu.memory_space<vmem>>, vector<8x128xbf16>
    %100 = arith.truncf %98 : vector<128x128xf32> to vector<128x128xbf16>
    %cst_29 = arith.constant dense<0.000000e+00> : vector<8x128xf32>
    %101 = tpu.matmul %99, %100, %cst_29 {dimension_numbers = #tpu.dot_dimension_numbers<[1], [0], [0], [1], [0, 0, 1, 1], [], []>} : vector<8x128xbf16>, vector<128x128xbf16>, vector<8x128xf32> -> vector<8x128xf32>
    %c0_30 = arith.constant 0 : index
    %c0_31 = arith.constant 0 : index
    %102 = vector.load %arg6[%c0_30, %c0_31] : memref<8x128xf32, #tpu.memory_space<vmem>>, vector<8x128xf32>
    tpu.vector_store %arg6[%c0_30, %c0_31], %101 {strides = array<i32>} : memref<8x128xf32, #tpu.memory_space<vmem>>, vector<8x128xf32>,
    %103 = vector.extract_strided_slice %3 {offsets = [6, 0], sizes = [1, 128], strides = [1, 1]} : vector<16x256xf32> to vector<1x128xf32>
    %104 = vector.extract_strided_slice %3 {offsets = [7, 0], sizes = [1, 128], strides = [1, 1]} : vector<16x256xf32> to vector<1x128xf32>
    %105 = vector.extract_strided_slice %3 {offsets = [8, 0], sizes = [1, 128], strides = [1, 1]} : vector<16x256xf32> to vector<1x128xf32>
    %106 = arith.truncf %101 : vector<8x128xf32> to vector<8x128xbf16>
    %c0_32 = arith.constant 0 : index
    %c0_33 = arith.constant 0 : index
    %c0_34 = arith.constant 0 : index
    %107 = vector.load %arg4[%c0_32, %c0_33, %c0_34] : memref<3x128x128xbf16, #tpu.memory_space<vmem>>, vector<1x128x128xbf16>
    %108 = vector.shape_cast %107 : vector<1x128x128xbf16> to vector<128x128xbf16>
    %cst_35 = arith.constant dense<0.000000e+00> : vector<8x128xf32>
    %109 = tpu.matmul %106, %108, %cst_35 {dimension_numbers = #tpu.dot_dimension_numbers<[1], [0], [0], [1], [0, 0, 1, 1], [], []>} : vector<8x128xbf16>, vector<128x128xbf16>, vector<8x128xf32> -> vector<8x128xf32>
    %110 = vector.broadcast %103 : vector<1x128xf32> to vector<8x128xf32>
    %111 = arith.addf %109, %110 : vector<8x128xf32>
    %112 = arith.truncf %111 : vector<8x128xf32> to vector<8x128xbf16>
    %c1_36 = arith.constant 1 : index
    %c0_37 = arith.constant 0 : index
    %c0_38 = arith.constant 0 : index
    %113 = vector.load %arg4[%c1_36, %c0_37, %c0_38] : memref<3x128x128xbf16, #tpu.memory_space<vmem>>, vector<1x128x128xbf16>
    %114 = vector.shape_cast %113 : vector<1x128x128xbf16> to vector<128x128xbf16>
    %cst_39 = arith.constant dense<0.000000e+00> : vector<8x128xf32>
    %115 = tpu.matmul %112, %114, %cst_39 {dimension_numbers = #tpu.dot_dimension_numbers<[1], [0], [0], [1], [0, 0, 1, 1], [], []>} : vector<8x128xbf16>, vector<128x128xbf16>, vector<8x128xf32> -> vector<8x128xf32>
    %116 = vector.broadcast %104 : vector<1x128xf32> to vector<8x128xf32>
    %117 = arith.addf %115, %116 : vector<8x128xf32>
    %cst_40 = arith.constant 0.000000e+00 : f32
    %118 = vector.broadcast %cst_40 : f32 to vector<8x128xf32>
    %119 = arith.maximumf %117, %118 : vector<8x128xf32>
    %120 = arith.truncf %119 : vector<8x128xf32> to vector<8x128xbf16>
    %c2 = arith.constant 2 : index
    %c0_41 = arith.constant 0 : index
    %c0_42 = arith.constant 0 : index
    %121 = vector.load %arg4[%c2, %c0_41, %c0_42] : memref<3x128x128xbf16, #tpu.memory_space<vmem>>, vector<1x128x128xbf16>
    %122 = vector.shape_cast %121 : vector<1x128x128xbf16> to vector<128x128xbf16>
    %cst_43 = arith.constant dense<0.000000e+00> : vector<8x128xf32>
    %123 = tpu.matmul %120, %122, %cst_43 {dimension_numbers = #tpu.dot_dimension_numbers<[1], [0], [0], [1], [0, 0, 1, 1], [], []>} : vector<8x128xbf16>, vector<128x128xbf16>, vector<8x128xf32> -> vector<8x128xf32>
    %124 = vector.broadcast %105 : vector<1x128xf32> to vector<8x128xf32>
    %125 = arith.addf %123, %124 : vector<8x128xf32>
    %c0_44 = arith.constant 0 : index
    %c0_45 = arith.constant 0 : index
    %126 = vector.load %arg7[%c0_44, %c0_45] : memref<8x128xf32, #tpu.memory_space<vmem>>, vector<8x128xf32>
    tpu.vector_store %arg7[%c0_44, %c0_45], %125 {strides = array<i32>} : memref<8x128xf32, #tpu.memory_space<vmem>>, vector<8x128xf32>,
    return
  }
}

</mosaic_0001>

<llo_original>
// kernel: fwd.1
$region0: #{fwd.1}
  #allocation0 [shape = 'u32[]', space=smem, size = 0x4, offset = 0x4, fixed_abs, tag = 'smem constant byte address 0x4 - core index']
  #allocation1 [shape = 'u32[144,128]{1,0:T(1,128)}', space=vmem, size = 0x12000, scoped, tag = 'internal scratch']
  %s0 = inlined_call_operand.hbm [shape: bf16[128,128], index: 0, kind: input, shape index: {}]
  %s1 = inlined_call_operand.hbm [shape: bf16[128,128], index: 1, kind: input, shape index: {}]
  %s2 = inlined_call_operand.vmem [shape: bf16[8,128], index: 2, kind: input, shape index: {}]
  %s3 = inlined_call_operand.hbm [shape: bf16[2,128,256], index: 3, kind: input, shape index: {}]
  %s4 = inlined_call_operand.hbm [shape: bf16[3,128,128], index: 4, kind: input, shape index: {}]
  %s5 = inlined_call_operand.hbm [shape: f32[16,256], index: 5, kind: input, shape index: {}]
  %s6 = inlined_call_operand.vmem [shape: f32[8,128], index: 6, kind: output, shape index: {0}]
  %s7 = inlined_call_operand.vmem [shape: f32[8,128], index: 7, kind: output, shape index: {1}]
  %8 = xla_tuple %s6, %s7
  %s9 = sld [smem:[#allocation0]]
  $region62: #{fwd.1} parent=0
    _
  %s11 = ssub.s32 1, %s9
  %s12 = scalar_select 0, %s11, %s9
  $region1: #{fwd.1} parent=0
    #allocation2 [shape = 'u8[32768]{0}', space=vmem, size = 0x8000, scoped, tag = 'input window, operand 0, single buffered']
    #allocation3 [shape = 's32[1]{0}', space=sflag, size = 0x4, scoped, tag = 'scoped memory for fwd.1']
    #allocation4 [shape = 'u8[32768]{0}', space=vmem, size = 0x8000, scoped, tag = 'input window, operand 1, single buffered']
    #allocation5 [shape = 's32[1]{0}', space=sflag, size = 0x4, scoped, tag = 'scoped memory for fwd.1']
    #allocation6 [shape = 'u8[131072]{0}', space=vmem, size = 0x20000, scoped, tag = 'input window, operand 3, single buffered']
    #allocation7 [shape = 'u8[98304]{0}', space=vmem, size = 0x18000, scoped, tag = 'input window, operand 4, single buffered']
    #allocation8 [shape = 's32[1]{0}', space=sflag, size = 0x4, scoped, tag = 'scoped memory for fwd.1']
    #allocation9 [shape = 'u8[16384]{0}', space=vmem, size = 0x4000, scoped, tag = 'input window, operand 5, single buffered']
    %13 = vsyncpa [#allocation3], 0
    %14 = vsyncpa [#allocation5], 0
    %15 = vsyncpa [#allocation8], 0
    // Predicated region
    $region2: #{fwd.1} parent=1 // pred_check
      _
    $region3: #{fwd.1} parent=1 // pred_check_branch
      %17 = sbr.rel (0) target = $region5
    $region4: #{fwd.1} parent=1 // pred_region
      %s19 = ssub.s32 1024, 1024
      %20 = vsyncadd [#allocation3], %s19
      %s21 = sshll.u32 [#allocation2], 4
      %s22 = int_to_ptr.vmem [resolvable:$true] %s21
      %27 = dma.hbm_to_vmem [thread:$0]  %s0, 1024, %s22, [#allocation3], 64, 64, 4
    $region5: #{fwd.1} parent=1 // pred_fallthru
      _
    // Predicated region
    $region6: #{fwd.1} parent=1 // pred_check
      _
    $region7: #{fwd.1} parent=1 // pred_check_branch
      %29 = sbr.rel (0) target = $region9
    $region8: #{fwd.1} parent=1 // pred_region
      %s31 = ssub.s32 1024, 1024
      %32 = vsyncadd [#allocation5], %s31
      %s33 = sshll.u32 [#allocation4], 4
      %s34 = int_to_ptr.vmem [resolvable:$true] %s33
      %39 = dma.hbm_to_vmem [thread:$0]  %s1, 1024, %s34, [#allocation5], 64, 64, 4
    $region9: #{fwd.1} parent=1 // pred_fallthru
      _
    // Predicated region
    $region10: #{fwd.1} parent=1 // pred_check
      _
    $region11: #{fwd.1} parent=1 // pred_check_branch
      %41 = sbr.rel (0) target = $region13
    $region12: #{fwd.1} parent=1 // pred_region
      _
    $region13: #{fwd.1} parent=1 // pred_fallthru
      _
    // Predicated region
    $region14: #{fwd.1} parent=1 // pred_check
      _
    $region15: #{fwd.1} parent=1 // pred_check_branch
      %43 = sbr.rel (0) target = $region17
    $region16: #{fwd.1} parent=1 // pred_region
      %s45 = ssub.s32 4096, 4096
      %46 = vsyncadd [#allocation5], %s45
      %s47 = sshll.u32 [#allocation6], 4
      %s48 = int_to_ptr.vmem [resolvable:$true] %s47
      %53 = dma.hbm_to_vmem [thread:$0]  %s3, 4096, %s48, [#allocation5], 128, 128, 8
    $region17: #{fwd.1} parent=1 // pred_fallthru
      _
    // Predicated region
    $region18: #{fwd.1} parent=1 // pred_check
      _
    $region19: #{fwd.1} parent=1 // pred_check_branch
      %55 = sbr.rel (0) target = $region21
    $region20: #{fwd.1} parent=1 // pred_region
      %s57 = ssub.s32 3072, 3072
      %58 = vsyncadd [#allocation8], %s57
      %s59 = sshll.u32 [#allocation7], 4
      %s60 = int_to_ptr.vmem [resolvable:$true] %s59
      %65 = dma.hbm_to_vmem [thread:$0]  %s4, 3072, %s60, [#allocation8], 64, 64, 4
    $region21: #{fwd.1} parent=1 // pred_fallthru
      _
    // Predicated region
    $region22: #{fwd.1} parent=1 // pred_check
      _
    $region23: #{fwd.1} parent=1 // pred_check_branch
      %67 = sbr.rel (0) target = $region25
    $region24: #{fwd.1} parent=1 // pred_region
      %s69 = ssub.s32 512, 512
      %70 = vsyncadd [#allocation8], %s69
      %s71 = sshll.u32 [#allocation9], 4
      %s72 = int_to_ptr.vmem [resolvable:$true] %s71
      %77 = dma.hbm_to_vmem [thread:$0]  %s5, 512, %s72, [#allocation8], 256, 256, 16
    $region25: #{fwd.1} parent=1 // pred_fallthru
      _
    // Predicated region
    $region26: #{fwd.1} parent=1 // pred_check
      _
    $region27: #{fwd.1} parent=1 // pred_check_branch
      %79 = sbr.rel (0) target = $region29
    $region28: #{fwd.1} parent=1 // pred_region
      %80 = dma.done [#allocation3], 1024
    $region29: #{fwd.1} parent=1 // pred_fallthru
      _
    // Predicated region
    $region30: #{fwd.1} parent=1 // pred_check
      _
    $region31: #{fwd.1} parent=1 // pred_check_branch
      %82 = sbr.rel (0) target = $region33
    $region32: #{fwd.1} parent=1 // pred_region
      %83 = dma.done [#allocation5], 1024
    $region33: #{fwd.1} parent=1 // pred_fallthru
      _
    // Predicated region
    $region34: #{fwd.1} parent=1 // pred_check
      _
    $region35: #{fwd.1} parent=1 // pred_check_branch
      %85 = sbr.rel (0) target = $region37
    $region36: #{fwd.1} parent=1 // pred_region
      %86 = dma.done [#allocation5], 4096
    $region37: #{fwd.1} parent=1 // pred_fallthru
      _
    // Predicated region
    $region38: #{fwd.1} parent=1 // pred_check
      _
    $region39: #{fwd.1} parent=1 // pred_check_branch
      %88 = sbr.rel (0) target = $region41
    $region40: #{fwd.1} parent=1 // pred_region
      %89 = dma.done [#allocation8], 3072
    $region41: #{fwd.1} parent=1 // pred_fallthru
      _
    // Predicated region
    $region42: #{fwd.1} parent=1 // pred_check
      _
    $region43: #{fwd.1} parent=1 // pred_check_branch
      %91 = sbr.rel (0) target = $region45
    $region44: #{fwd.1} parent=1 // pred_region
      %92 = dma.done [#allocation8], 512
    $region45: #{fwd.1} parent=1 // pred_fallthru
      _
    %v94 = vld [vmem:[#allocation2] sm:$0xf]
    %v95 = vld [vmem:[#allocation2 + $0x4] sm:$0xf]
    %v96 = vld [vmem:[#allocation2 + $0x8] sm:$0xf]
    %v97 = vld [vmem:[#allocation2 + $0xc] sm:$0xf]
    %v98 = vld [vmem:[#allocation2 + $0x10] sm:$0xf]
    %v99 = vld [vmem:[#allocation2 + $0x14] sm:$0xf]
    %v100 = vld [vmem:[#allocation2 + $0x18] sm:$0xf]
    %v101 = vld [vmem:[#allocation2 + $0x1c] sm:$0xf]
    %v102 = vld [vmem:[#allocation2 + $0x20] sm:$0xf]
    %v103 = vld [vmem:[#allocation2 + $0x24] sm:$0xf]
    %v104 = vld [vmem:[#allocation2 + $0x28] sm:$0xf]
    %v105 = vld [vmem:[#allocation2 + $0x2c] sm:$0xf]
    %v106 = vld [vmem:[#allocation2 + $0x30] sm:$0xf]
    %v107 = vld [vmem:[#allocation2 + $0x34] sm:$0xf]
    %v108 = vld [vmem:[#allocation2 + $0x38] sm:$0xf]
    %v109 = vld [vmem:[#allocation2 + $0x3c] sm:$0xf]
    %v110 = vld [vmem:[#allocation4] sm:$0xf]
    %v111 = vld [vmem:[#allocation4 + $0x4] sm:$0xf]
    %v112 = vld [vmem:[#allocation4 + $0x8] sm:$0xf]
    %v113 = vld [vmem:[#allocation4 + $0xc] sm:$0xf]
    %v114 = vld [vmem:[#allocation4 + $0x10] sm:$0xf]
    %v115 = vld [vmem:[#allocation4 + $0x14] sm:$0xf]
    %v116 = vld [vmem:[#allocation4 + $0x18] sm:$0xf]
    %v117 = vld [vmem:[#allocation4 + $0x1c] sm:$0xf]
    %v118 = vld [vmem:[#allocation4 + $0x20] sm:$0xf]
    %v119 = vld [vmem:[#allocation4 + $0x24] sm:$0xf]
    %v120 = vld [vmem:[#allocation4 + $0x28] sm:$0xf]
    %v121 = vld [vmem:[#allocation4 + $0x2c] sm:$0xf]
    %v122 = vld [vmem:[#allocation4 + $0x30] sm:$0xf]
    %v123 = vld [vmem:[#allocation4 + $0x34] sm:$0xf]
    %v124 = vld [vmem:[#allocation4 + $0x38] sm:$0xf]
    %v125 = vld [vmem:[#allocation4 + $0x3c] sm:$0xf]
    %v126 = vld [vmem:[#allocation9] sm:$0xff]
    %v127 = vld [vmem:[#allocation9 + $0x8] sm:$0xff]
    %v128 = vld [vmem:[#allocation9 + $0x10] sm:$0xff]
    %v129 = vlaneseq
    %v130 = vshrl.u32 %v129, 7
    %v131 = vadd.s32 %v130, 8
    %v132 = vadd.s32 %v130, 16
    %v133 = vadd.s32 %v130, 24
    %v134 = vadd.s32 %v130, 32
    %v135 = vadd.s32 %v130, 40
    %v136 = vadd.s32 %v130, 48
    %v137 = vadd.s32 %v130, 56
    %v138 = vadd.s32 %v130, 64
    %v139 = vadd.s32 %v130, 72
    %v140 = vadd.s32 %v130, 80
    %v141 = vadd.s32 %v130, 88
    %v142 = vadd.s32 %v130, 96
    %v143 = vadd.s32 %v130, 104
    %v144 = vadd.s32 %v130, 112
    %v145 = vadd.s32 %v130, 120
    %vm146 = vcmp.lt.s32.totalorder %v130, 32
    %vm147 = vcmp.lt.s32.totalorder %v131, 32
    %vm148 = vcmp.lt.s32.totalorder %v132, 32
    %vm149 = vcmp.lt.s32.totalorder %v133, 32
    %vm150 = vcmp.lt.s32.totalorder %v134, 32
    %vm151 = vcmp.lt.s32.totalorder %v135, 32
    %vm152 = vcmp.lt.s32.totalorder %v136, 32
    %vm153 = vcmp.lt.s32.totalorder %v137, 32
    %vm154 = vcmp.lt.s32.totalorder %v138, 32
    %vm155 = vcmp.lt.s32.totalorder %v139, 32
    %vm156 = vcmp.lt.s32.totalorder %v140, 32
    %vm157 = vcmp.lt.s32.totalorder %v141, 32
    %vm158 = vcmp.lt.s32.totalorder %v142, 32
    %vm159 = vcmp.lt.s32.totalorder %v143, 32
    %vm160 = vcmp.lt.s32.totalorder %v144, 32
    %vm161 = vcmp.lt.s32.totalorder %v145, 32
    %v162 = vsel %vm146, 1, 0
    %v163 = vsel %vm147, 1, 0
    %v164 = vsel %vm148, 1, 0
    %v165 = vsel %vm149, 1, 0
    %v166 = vsel %vm150, 1, 0
    %v167 = vsel %vm151, 1, 0
    %v168 = vsel %vm152, 1, 0
    %v169 = vsel %vm153, 1, 0
    %v170 = vsel %vm154, 1, 0
    %v171 = vsel %vm155, 1, 0
    %v172 = vsel %vm156, 1, 0
    %v173 = vsel %vm157, 1, 0
    %v174 = vsel %vm158, 1, 0
    %v175 = vsel %vm159, 1, 0
    %v176 = vsel %vm160, 1, 0
    %v177 = vsel %vm161, 1, 0
    %v178 = vcvt.s32.f32 %v162
    %v179 = vcvt.s32.f32 %v163
    %v180 = vcvt.s32.f32 %v164
    %v181 = vcvt.s32.f32 %v165
    %v182 = vcvt.s32.f32 %v166
    %v183 = vcvt.s32.f32 %v167
    %v184 = vcvt.s32.f32 %v168
    %v185 = vcvt.s32.f32 %v169
    %v186 = vcvt.s32.f32 %v170
    %v187 = vcvt.s32.f32 %v171
    %v188 = vcvt.s32.f32 %v172
    %v189 = vcvt.s32.f32 %v173
    %v190 = vcvt.s32.f32 %v174
    %v191 = vcvt.s32.f32 %v175
    %v192 = vcvt.s32.f32 %v176
    %v193 = vcvt.s32.f32 %v177
    %v194 = vld [vmem:[#allocation6] sm:$0xff]
    %v195 = vld [vmem:[#allocation6 + $0x8] sm:$0xff]
    %v196 = vld [vmem:[#allocation6 + $0x10] sm:$0xff]
    %v197 = vld [vmem:[#allocation6 + $0x18] sm:$0xff]
    %v198 = vld [vmem:[#allocation6 + $0x20] sm:$0xff]
    %v199 = vld [vmem:[#allocation6 + $0x28] sm:$0xff]
    %v200 = vld [vmem:[#allocation6 + $0x30] sm:$0xff]
    %v201 = vld [vmem:[#allocation6 + $0x38] sm:$0xff]
    %v202 = vld [vmem:[#allocation6 + $0x40] sm:$0xff]
    %v203 = vld [vmem:[#allocation6 + $0x48] sm:$0xff]
    %v204 = vld [vmem:[#allocation6 + $0x50] sm:$0xff]
    %v205 = vld [vmem:[#allocation6 + $0x58] sm:$0xff]
    %v206 = vld [vmem:[#allocation6 + $0x60] sm:$0xff]
    %v207 = vld [vmem:[#allocation6 + $0x68] sm:$0xff]
    %v208 = vld [vmem:[#allocation6 + $0x70] sm:$0xff]
    %v209 = vld [vmem:[#allocation6 + $0x78] sm:$0xff]
    %v226 = vunpack.c.l.b16 %v110
    %v227 = vunpack.c.l.b16 %v111
    %v228 = vunpack.c.l.b16 %v112
    %v229 = vunpack.c.l.b16 %v113
    %v230 = vunpack.c.l.b16 %v114
    %v231 = vunpack.c.l.b16 %v115
    %v232 = vunpack.c.l.b16 %v116
    %v233 = vunpack.c.l.b16 %v117
    %v234 = vunpack.c.l.b16 %v118
    %v235 = vunpack.c.l.b16 %v119
    %v236 = vunpack.c.l.b16 %v120
    %v237 = vunpack.c.l.b16 %v121
    %v238 = vunpack.c.l.b16 %v122
    %v239 = vunpack.c.l.b16 %v123
    %v240 = vunpack.c.l.b16 %v124
    %v241 = vunpack.c.l.b16 %v125
    %v242 = vpack.c.b16 %v227, %v226
    %v243 = vpack.c.b16 %v229, %v228
    %v244 = vpack.c.b16 %v231, %v230
    %v245 = vpack.c.b16 %v233, %v232
    %v246 = vpack.c.b16 %v235, %v234
    %v247 = vpack.c.b16 %v237, %v236
    %v248 = vpack.c.b16 %v239, %v238
    %v249 = vpack.c.b16 %v241, %v240
    %v274 = vunpack.c.l.b16 %v194
    %v275 = vunpack.c.h.b16 %v194
    %v276 = vunpack.c.l.b16 %v195
    %v277 = vunpack.c.h.b16 %v195
    %v278 = vunpack.c.l.b16 %v196
    %v279 = vunpack.c.h.b16 %v196
    %v280 = vunpack.c.l.b16 %v197
    %v281 = vunpack.c.h.b16 %v197
    %v282 = vunpack.c.l.b16 %v198
    %v283 = vunpack.c.h.b16 %v198
    %v284 = vunpack.c.l.b16 %v199
    %v285 = vunpack.c.h.b16 %v199
    %v286 = vunpack.c.l.b16 %v200
    %v287 = vunpack.c.h.b16 %v200
    %v288 = vunpack.c.l.b16 %v201
    %v289 = vunpack.c.h.b16 %v201
    %v290 = vunpack.c.l.b16 %v202
    %v291 = vunpack.c.h.b16 %v202
    %v292 = vunpack.c.l.b16 %v203
    %v293 = vunpack.c.h.b16 %v203
    %v294 = vunpack.c.l.b16 %v204
    %v295 = vunpack.c.h.b16 %v204
    %v296 = vunpack.c.l.b16 %v205
    %v297 = vunpack.c.h.b16 %v205
    %v298 = vunpack.c.l.b16 %v206
    %v299 = vunpack.c.h.b16 %v206
    %v300 = vunpack.c.l.b16 %v207
    %v301 = vunpack.c.h.b16 %v207
    %v302 = vunpack.c.l.b16 %v208
    %v303 = vunpack.c.h.b16 %v208
    %v304 = vunpack.c.l.b16 %v209
    %v305 = vunpack.c.h.b16 %v209
    %v306 = vpack.c.b16 %v276, %v274
    %v307 = vpack.c.b16 %v277, %v275
    %v308 = vpack.c.b16 %v280, %v278
    %v309 = vpack.c.b16 %v281, %v279
    %v310 = vpack.c.b16 %v284, %v282
    %v311 = vpack.c.b16 %v285, %v283
    %v312 = vpack.c.b16 %v288, %v286
    %v313 = vpack.c.b16 %v289, %v287
    %v314 = vpack.c.b16 %v292, %v290
    %v315 = vpack.c.b16 %v293, %v291
    %v316 = vpack.c.b16 %v296, %v294
    %v317 = vpack.c.b16 %v297, %v295
    %v318 = vpack.c.b16 %v300, %v298
    %v319 = vpack.c.b16 %v301, %v299
    %v320 = vpack.c.b16 %v304, %v302
    %v321 = vpack.c.b16 %v305, %v303
    %338 = vmatprep.subr.bf16.mxu0 %v307
    %339 = vmatpush1.bf16.msra.mxu0 %v306
    %340 = vmatprep.subr.bf16.mxu0 %v309
    %341 = vmatpush1.bf16.msra.mxu0 %v308
    %342 = vmatprep.subr.bf16.mxu0 %v311
    %343 = vmatpush1.bf16.msra.mxu0 %v310
    %344 = vmatprep.subr.bf16.mxu0 %v313
    %345 = vmatpush1.bf16.msra.mxu0 %v312
    %346 = vmatprep.subr.bf16.mxu0 %v315
    %347 = vmatpush1.bf16.msra.mxu0 %v314
    %348 = vmatprep.subr.bf16.mxu0 %v317
    %349 = vmatpush1.bf16.msra.mxu0 %v316
    %350 = vmatprep.subr.bf16.mxu0 %v319
    %351 = vmatpush1.bf16.msra.mxu0 %v318
    %352 = vmatprep.subr.bf16.mxu0 %v321
    %353 = vmatpush1.bf16.msra.mxu0 %v320
    %354 = vmatprep.subr.bf16.mxu0 0
    %355 = vmatpush1.bf16.msra.mxu0 0
    %356 = vmatprep.subr.bf16.mxu0 0
    %357 = vmatpush1.bf16.msra.mxu0 0
    %358 = vmatprep.subr.bf16.mxu0 0
    %359 = vmatpush1.bf16.msra.mxu0 0
    %360 = vmatprep.subr.bf16.mxu0 0
    %361 = vmatpush1.bf16.msra.mxu0 0
    %362 = vmatprep.subr.bf16.mxu0 0
    %363 = vmatpush1.bf16.msra.mxu0 0
    %364 = vmatprep.subr.bf16.mxu0 0
    %365 = vmatpush1.bf16.msra.mxu0 0
    %366 = vmatprep.subr.bf16.mxu0 0
    %367 = vmatpush1.bf16.msra.mxu0 0
    %368 = vmatprep.subr.bf16.mxu0 0
    %369 = vmatpush1.bf16.msra.mxu0 0
    %370 = vmatprep.mubr.bf16.mxu0 0
    %371 = vmatmul.mubr.bf16.gmra.mrb[0].mxu0 %v242
    %v372 = vpop.f32.mrb[0].mxu0
    %v373 = vadd.f32 0.0, %v372
    %v374 = vpop.f32.mrb[0].mxu0
    %v375 = vadd.f32 0.0, %v374
    %v376 = vpop.f32.mrb[0].mxu0
    %v377 = vadd.f32 0.0, %v376
    %v378 = vpop.f32.mrb[0].mxu0
    %v379 = vadd.f32 0.0, %v378
    %380 = vmatprep.mubr.bf16.mxu0 0
    %381 = vmatmul.mubr.bf16.gmra.mrb[0].mxu0 %v243
    %v382 = vpop.f32.mrb[0].mxu0
    %v383 = vadd.f32 0.0, %v382
    %v384 = vpop.f32.mrb[0].mxu0
    %v385 = vadd.f32 0.0, %v384
    %v386 = vpop.f32.mrb[0].mxu0
    %v387 = vadd.f32 0.0, %v386
    %v388 = vpop.f32.mrb[0].mxu0
    %v389 = vadd.f32 0.0, %v388
    %390 = vmatprep.mubr.bf16.mxu0 0
    %391 = vmatmul.mubr.bf16.gmra.mrb[0].mxu0 %v244
    %v392 = vpop.f32.mrb[0].mxu0
    %v393 = vadd.f32 0.0, %v392
    %v394 = vpop.f32.mrb[0].mxu0
    %v395 = vadd.f32 0.0, %v394
    %v396 = vpop.f32.mrb[0].mxu0
    %v397 = vadd.f32 0.0, %v396
    %v398 = vpop.f32.mrb[0].mxu0
    %v399 = vadd.f32 0.0, %v398
    %400 = vmatprep.mubr.bf16.mxu0 0
    %401 = vmatmul.mubr.bf16.gmra.mrb[0].mxu0 %v245
    %v402 = vpop.f32.mrb[0].mxu0
    %v403 = vadd.f32 0.0, %v402
    %v404 = vpop.f32.mrb[0].mxu0
    %v405 = vadd.f32 0.0, %v404
    %v406 = vpop.f32.mrb[0].mxu0
    %v407 = vadd.f32 0.0, %v406
    %v408 = vpop.f32.mrb[0].mxu0
    %v409 = vadd.f32 0.0, %v408
    %410 = vmatprep.mubr.bf16.mxu0 0
    %411 = vmatmul.mubr.bf16.gmra.mrb[0].mxu0 %v246
    %v412 = vpop.f32.mrb[0].mxu0
    %v413 = vadd.f32 0.0, %v412
    %v414 = vpop.f32.mrb[0].mxu0
    %v415 = vadd.f32 0.0, %v414
    %v416 = vpop.f32.mrb[0].mxu0
    %v417 = vadd.f32 0.0, %v416
    %v418 = vpop.f32.mrb[0].mxu0
    %v419 = vadd.f32 0.0, %v418
    %420 = vmatprep.mubr.bf16.mxu0 0
    %421 = vmatmul.mubr.bf16.gmra.mrb[0].mxu0 %v247
    %v422 = vpop.f32.mrb[0].mxu0
    %v423 = vadd.f32 0.0, %v422
    %v424 = vpop.f32.mrb[0].mxu0
    %v425 = vadd.f32 0.0, %v424
    %v426 = vpop.f32.mrb[0].mxu0
    %v427 = vadd.f32 0.0, %v426
    %v428 = vpop.f32.mrb[0].mxu0
    %v429 = vadd.f32 0.0, %v428
    %430 = vmatprep.mubr.bf16.mxu0 0
    %431 = vmatmul.mubr.bf16.gmra.mrb[0].mxu0 %v248
    %v432 = vpop.f32.mrb[0].mxu0
    %v433 = vadd.f32 0.0, %v432
    %v434 = vpop.f32.mrb[0].mxu0
    %v435 = vadd.f32 0.0, %v434
    %v436 = vpop.f32.mrb[0].mxu0
    %v437 = vadd.f32 0.0, %v436
    %v438 = vpop.f32.mrb[0].mxu0
    %v439 = vadd.f32 0.0, %v438
    %440 = vmatprep.mubr.bf16.mxu0 0
    %441 = vmatmul.mubr.bf16.gmra.mrb[0].mxu0 %v249
    %v442 = vpop.f32.mrb[0].mxu0
    %v443 = vadd.f32 0.0, %v442
    %v444 = vpop.f32.mrb[0].mxu0
    %v445 = vadd.f32 0.0, %v444
    %v446 = vpop.f32.mrb[0].mxu0
    %v447 = vadd.f32 0.0, %v446
    %v448 = vpop.f32.mrb[0].mxu0
    %v449 = vadd.f32 0.0, %v448
    %450 = vdwg.mxu0
    %v451 = vpack.c.bf16 %v377, %v373
    %v452 = vpack.c.bf16 %v387, %v383
    %v453 = vpack.c.bf16 %v397, %v393
    %v454 = vpack.c.bf16 %v407, %v403
    %v455 = vpack.c.bf16 %v417, %v413
    %v456 = vpack.c.bf16 %v427, %v423
    %v457 = vpack.c.bf16 %v437, %v433
    %v458 = vpack.c.bf16 %v447, %v443
    %v459 = vlaneseq
    %v460 = vshrl.u32 %v459, 7
    %v461 = vsub.s32 0, %v460
    %v462 = vrot.slane %v126, %v461
    %v479 = vunpack.c.l.b16 %v94
    %v480 = vunpack.c.l.b16 %v95
    %v481 = vunpack.c.l.b16 %v96
    %v482 = vunpack.c.l.b16 %v97
    %v483 = vunpack.c.l.b16 %v98
    %v484 = vunpack.c.l.b16 %v99
    %v485 = vunpack.c.l.b16 %v100
    %v486 = vunpack.c.l.b16 %v101
    %v487 = vunpack.c.l.b16 %v102
    %v488 = vunpack.c.l.b16 %v103
    %v489 = vunpack.c.l.b16 %v104
    %v490 = vunpack.c.l.b16 %v105
    %v491 = vunpack.c.l.b16 %v106
    %v492 = vunpack.c.l.b16 %v107
    %v493 = vunpack.c.l.b16 %v108
    %v494 = vunpack.c.l.b16 %v109
    %v495 = vpack.c.b16 %v480, %v479
    %v496 = vpack.c.b16 %v482, %v481
    %v497 = vpack.c.b16 %v484, %v483
    %v498 = vpack.c.b16 %v486, %v485
    %v499 = vpack.c.b16 %v488, %v487
    %v500 = vpack.c.b16 %v490, %v489
    %v501 = vpack.c.b16 %v492, %v491
    %v502 = vpack.c.b16 %v494, %v493
    %511 = vmatprep.subr.bf16.mxu0 0
    %512 = vmatpush1.bf16.msra.mxu0 %v451
    %513 = vmatprep.subr.bf16.mxu0 0
    %514 = vmatpush1.bf16.msra.mxu0 %v452
    %515 = vmatprep.subr.bf16.mxu0 0
    %516 = vmatpush1.bf16.msra.mxu0 %v453
    %517 = vmatprep.subr.bf16.mxu0 0
    %518 = vmatpush1.bf16.msra.mxu0 %v454
    %519 = vmatprep.subr.bf16.mxu0 0
    %520 = vmatpush1.bf16.msra.mxu0 %v455
    %521 = vmatprep.subr.bf16.mxu0 0
    %522 = vmatpush1.bf16.msra.mxu0 %v456
    %523 = vmatprep.subr.bf16.mxu0 0
    %524 = vmatpush1.bf16.msra.mxu0 %v457
    %525 = vmatprep.subr.bf16.mxu0 0
    %526 = vmatpush1.bf16.msra.mxu0 %v458
    %527 = vmatprep.subr.bf16.mxu0 0
    %528 = vmatpush1.bf16.msra.mxu0 0
    %529 = vmatprep.subr.bf16.mxu0 0
    %530 = vmatpush1.bf16.msra.mxu0 0
    %531 = vmatprep.subr.bf16.mxu0 0
    %532 = vmatpush1.bf16.msra.mxu0 0
    %533 = vmatprep.subr.bf16.mxu0 0
    %534 = vmatpush1.bf16.msra.mxu0 0
    %535 = vmatprep.subr.bf16.mxu0 0
    %536 = vmatpush1.bf16.msra.mxu0 0
    %537 = vmatprep.subr.bf16.mxu0 0
    %538 = vmatpush1.bf16.msra.mxu0 0
    %539 = vmatprep.subr.bf16.mxu0 0
    %540 = vmatpush1.bf16.msra.mxu0 0
    %541 = vmatprep.subr.bf16.mxu0 0
    %542 = vmatpush1.bf16.msra.mxu0 0
    %543 = vmatprep.mubr.bf16.mxu0 0
    %544 = vmatmul.mubr.bf16.gmra.mrb[0].mxu0 %v495
    %v545 = vpop.f32.mrb[0].mxu0
    %v546 = vadd.f32 %v462, %v545
    %v547 = vpop.f32.mrb[0].mxu0
    %v548 = vpop.f32.mrb[0].mxu0
    %v549 = vadd.f32 %v462, %v548
    %v550 = vpop.f32.mrb[0].mxu0
    %551 = vmatprep.mubr.bf16.mxu0 0
    %552 = vmatmul.mubr.bf16.gmra.mrb[0].mxu0 %v496
    %v553 = vpop.f32.mrb[0].mxu0
    %v554 = vadd.f32 %v462, %v553
    %v555 = vpop.f32.mrb[0].mxu0
    %v556 = vpop.f32.mrb[0].mxu0
    %v557 = vadd.f32 %v462, %v556
    %v558 = vpop.f32.mrb[0].mxu0
    %559 = vmatprep.mubr.bf16.mxu0 0
    %560 = vmatmul.mubr.bf16.gmra.mrb[0].mxu0 %v497
    %v561 = vpop.f32.mrb[0].mxu0
    %v562 = vadd.f32 %v462, %v561
    %v563 = vpop.f32.mrb[0].mxu0
    %v564 = vpop.f32.mrb[0].mxu0
    %v565 = vadd.f32 %v462, %v564
    %v566 = vpop.f32.mrb[0].mxu0
    %567 = vmatprep.mubr.bf16.mxu0 0
    %568 = vmatmul.mubr.bf16.gmra.mrb[0].mxu0 %v498
    %v569 = vpop.f32.mrb[0].mxu0
    %v570 = vadd.f32 %v462, %v569
    %v571 = vpop.f32.mrb[0].mxu0
    %v572 = vpop.f32.mrb[0].mxu0
    %v573 = vadd.f32 %v462, %v572
    %v574 = vpop.f32.mrb[0].mxu0
    %575 = vmatprep.mubr.bf16.mxu0 0
    %576 = vmatmul.mubr.bf16.gmra.mrb[0].mxu0 %v499
    %v577 = vpop.f32.mrb[0].mxu0
    %v578 = vadd.f32 %v462, %v577
    %v579 = vpop.f32.mrb[0].mxu0
    %v580 = vpop.f32.mrb[0].mxu0
    %v581 = vadd.f32 %v462, %v580
    %v582 = vpop.f32.mrb[0].mxu0
    %583 = vmatprep.mubr.bf16.mxu0 0
    %584 = vmatmul.mubr.bf16.gmra.mrb[0].mxu0 %v500
    %v585 = vpop.f32.mrb[0].mxu0
    %v586 = vadd.f32 %v462, %v585
    %v587 = vpop.f32.mrb[0].mxu0
    %v588 = vpop.f32.mrb[0].mxu0
    %v589 = vadd.f32 %v462, %v588
    %v590 = vpop.f32.mrb[0].mxu0
    %591 = vmatprep.mubr.bf16.mxu0 0
    %592 = vmatmul.mubr.bf16.gmra.mrb[0].mxu0 %v501
    %v593 = vpop.f32.mrb[0].mxu0
    %v594 = vadd.f32 %v462, %v593
    %v595 = vpop.f32.mrb[0].mxu0
    %v596 = vpop.f32.mrb[0].mxu0
    %v597 = vadd.f32 %v462, %v596
    %v598 = vpop.f32.mrb[0].mxu0
    %599 = vmatprep.mubr.bf16.mxu0 0
    %600 = vmatmul.mubr.bf16.gmra.mrb[0].mxu0 %v502
    %v601 = vpop.f32.mrb[0].mxu0
    %v602 = vadd.f32 %v462, %v601
    %v603 = vpop.f32.mrb[0].mxu0
    %v604 = vpop.f32.mrb[0].mxu0
    %v605 = vadd.f32 %v462, %v604
    %v606 = vpop.f32.mrb[0].mxu0
    %607 = vdwg.mxu0
    %v608 = vmax.f32 %v546, 0.0
    %v609 = vmax.f32 %v549, 0.0
    %v610 = vmax.f32 %v554, 0.0
    %v611 = vmax.f32 %v557, 0.0
    %v612 = vmax.f32 %v562, 0.0
    %v613 = vmax.f32 %v565, 0.0
    %v614 = vmax.f32 %v570, 0.0
    %v615 = vmax.f32 %v573, 0.0
    %v616 = vmax.f32 %v578, 0.0
    %v617 = vmax.f32 %v581, 0.0
    %v618 = vmax.f32 %v586, 0.0
    %v619 = vmax.f32 %v589, 0.0
    %v620 = vmax.f32 %v594, 0.0
    %v621 = vmax.f32 %v597, 0.0
    %v622 = vmax.f32 %v602, 0.0
    %v623 = vmax.f32 %v605, 0.0
    %v624 = vlaneseq
    %v625 = vshrl.u32 %v624, 7
    %v626 = vsub.s32 0, %v625
    %v627 = vrot.slane %v127, %v626
    %v628 = vadd.f32 %v375, %v627
    %v629 = vadd.f32 %v379, %v627
    %v630 = vadd.f32 %v385, %v627
    %v631 = vadd.f32 %v389, %v627
    %v632 = vadd.f32 %v395, %v627
    %v633 = vadd.f32 %v399, %v627
    %v634 = vadd.f32 %v405, %v627
    %v635 = vadd.f32 %v409, %v627
    %v636 = vadd.f32 %v415, %v627
    %v637 = vadd.f32 %v419, %v627
    %v638 = vadd.f32 %v425, %v627
    %v639 = vadd.f32 %v429, %v627
    %v640 = vadd.f32 %v435, %v627
    %v641 = vadd.f32 %v439, %v627
    %v642 = vadd.f32 %v445, %v627
    %v643 = vadd.f32 %v449, %v627
    %v644 = vmax.f32 %v628, 0.0
    %v645 = vmax.f32 %v629, 0.0
    %v646 = vmax.f32 %v630, 0.0
    %v647 = vmax.f32 %v631, 0.0
    %v648 = vmax.f32 %v632, 0.0
    %v649 = vmax.f32 %v633, 0.0
    %v650 = vmax.f32 %v634, 0.0
    %v651 = vmax.f32 %v635, 0.0
    %v652 = vmax.f32 %v636, 0.0
    %v653 = vmax.f32 %v637, 0.0
    %v654 = vmax.f32 %v638, 0.0
    %v655 = vmax.f32 %v639, 0.0
    %v656 = vmax.f32 %v640, 0.0
    %v657 = vmax.f32 %v641, 0.0
    %v658 = vmax.f32 %v642, 0.0
    %v659 = vmax.f32 %v643, 0.0
    %v660 = vadd.f32 %v608, %v644
    %v661 = vadd.f32 %v609, %v645
    %v662 = vadd.f32 %v610, %v646
    %v663 = vadd.f32 %v611, %v647
    %v664 = vadd.f32 %v612, %v648
    %v665 = vadd.f32 %v613, %v649
    %v666 = vadd.f32 %v614, %v650
    %v667 = vadd.f32 %v615, %v651
    %v668 = vadd.f32 %v616, %v652
    %v669 = vadd.f32 %v617, %v653
    %v670 = vadd.f32 %v618, %v654
    %v671 = vadd.f32 %v619, %v655
    %v672 = vadd.f32 %v620, %v656
    %v673 = vadd.f32 %v621, %v657
    %v674 = vadd.f32 %v622, %v658
    %v675 = vadd.f32 %v623, %v659
    %v676 = vmul.f32 %v660, %v178
    %v677 = vmul.f32 %v661, %v179
    %v678 = vmul.f32 %v662, %v180
    %v679 = vmul.f32 %v663, %v181
    %v680 = vmul.f32 %v664, %v182
    %v681 = vmul.f32 %v665, %v183
    %v682 = vmul.f32 %v666, %v184
    %v683 = vmul.f32 %v667, %v185
    %v684 = vmul.f32 %v668, %v186
    %v685 = vmul.f32 %v669, %v187
    %v686 = vmul.f32 %v670, %v188
    %v687 = vmul.f32 %v671, %v189
    %v688 = vmul.f32 %v672, %v190
    %v689 = vmul.f32 %v673, %v191
    %v690 = vmul.f32 %v674, %v192
    %v691 = vmul.f32 %v675, %v193
    %v692 = vadd.f32 %v676, %v677
    %v693 = vadd.f32 %v692, %v678
    %v694 = vadd.f32 %v693, %v679
    %v695 = vadd.f32 %v694, %v680
    %v696 = vadd.f32 %v695, %v681
    %v697 = vadd.f32 %v696, %v682
    %v698 = vadd.f32 %v697, %v683
    %v699 = vadd.f32 %v698, %v684
    %v700 = vadd.f32 %v699, %v685
    %v701 = vadd.f32 %v700, %v686
    %v702 = vadd.f32 %v701, %v687
    %v703 = vadd.f32 %v702, %v688
    %v704 = vadd.f32 %v703, %v689
    %v705 = vadd.f32 %v704, %v690
    %v706 = vadd.f32 %v705, %v691
    %v707 = vrot.slane %v706, 4
    %v708 = vadd.f32 %v706, %v707
    %v709 = vrot.slane %v708, 2
    %v710 = vadd.f32 %v708, %v709
    %v711 = vrot.slane %v710, 1
    %v712 = vadd.f32 %v710, %v711
    %v713 = vmul.f32 %v712, 0.03125
    %v714 = vsub.f32 %v676, %v713
    %v715 = vsub.f32 %v677, %v713
    %v716 = vsub.f32 %v678, %v713
    %v717 = vsub.f32 %v679, %v713
    %v718 = vsub.f32 %v680, %v713
    %v719 = vsub.f32 %v681, %v713
    %v720 = vsub.f32 %v682, %v713
    %v721 = vsub.f32 %v683, %v713
    %v722 = vsub.f32 %v684, %v713
    %v723 = vsub.f32 %v685, %v713
    %v724 = vsub.f32 %v686, %v713
    %v725 = vsub.f32 %v687, %v713
    %v726 = vsub.f32 %v688, %v713
    %v727 = vsub.f32 %v689, %v713
    %v728 = vsub.f32 %v690, %v713
    %v729 = vsub.f32 %v691, %v713
    %v730 = vmul.f32 %v714, %v178
    %v731 = vmul.f32 %v715, %v179
    %v732 = vmul.f32 %v716, %v180
    %v733 = vmul.f32 %v717, %v181
    %v734 = vmul.f32 %v718, %v182
    %v735 = vmul.f32 %v719, %v183
    %v736 = vmul.f32 %v720, %v184
    %v737 = vmul.f32 %v721, %v185
    %v738 = vmul.f32 %v722, %v186
    %v739 = vmul.f32 %v723, %v187
    %v740 = vmul.f32 %v724, %v188
    %v741 = vmul.f32 %v725, %v189
    %v742 = vmul.f32 %v726, %v190
    %v743 = vmul.f32 %v727, %v191
    %v744 = vmul.f32 %v728, %v192
    %v745 = vmul.f32 %v729, %v193
    %v746 = vmul.f32 %v730, %v730
    %v747 = vmul.f32 %v731, %v731
    %v748 = vmul.f32 %v732, %v732
    %v749 = vmul.f32 %v733, %v733
    %v750 = vmul.f32 %v734, %v734
    %v751 = vmul.f32 %v735, %v735
    %v752 = vmul.f32 %v736, %v736
    %v753 = vmul.f32 %v737, %v737
    %v754 = vmul.f32 %v738, %v738
    %v755 = vmul.f32 %v739, %v739
    %v756 = vmul.f32 %v740, %v740
    %v757 = vmul.f32 %v741, %v741
    %v758 = vmul.f32 %v742, %v742
    %v759 = vmul.f32 %v743, %v743
    %v760 = vmul.f32 %v744, %v744
    %v761 = vmul.f32 %v745, %v745
    %v762 = vadd.f32 %v746, %v747
    %v763 = vadd.f32 %v762, %v748
    %v764 = vadd.f32 %v763, %v749
    %v765 = vadd.f32 %v764, %v750
    %v766 = vadd.f32 %v765, %v751
    %v767 = vadd.f32 %v766, %v752
    %v768 = vadd.f32 %v767, %v753
    %v769 = vadd.f32 %v768, %v754
    %v770 = vadd.f32 %v769, %v755
    %v771 = vadd.f32 %v770, %v756
    %v772 = vadd.f32 %v771, %v757
    %v773 = vadd.f32 %v772, %v758
    %v774 = vadd.f32 %v773, %v759
    %v775 = vadd.f32 %v774, %v760
    %v776 = vadd.f32 %v775, %v761
    %v777 = vrot.slane %v776, 4
    %v778 = vadd.f32 %v776, %v777
    %v779 = vrot.slane %v778, 2
    %v780 = vadd.f32 %v778, %v779
    %v781 = vrot.slane %v780, 1
    %v782 = vadd.f32 %v780, %v781
    %v783 = vmul.f32 %v782, 0.03125
    %v784 = vadd.f32 %v783, 1e-05
    %v785 = vrsqrt.pop %v784
    %v786 = vmul.f32 %v126, %v785
    %v787 = vmul.f32 %v713, %v786
    %v789 = vrot.slane %v787, 7
    %v791 = vsub.f32 %v126, %v789
    %v792 = vlaneseq
    %v793 = vshrl.u32 %v792, 7
    %v794 = vsub.s32 1, %v793
    %v795 = vrot.slane %v786, %v794
    %v796 = vmul.f32 %v660, %v795
    %v797 = vmul.f32 %v661, %v795
    %v798 = vmul.f32 %v662, %v795
    %v799 = vmul.f32 %v663, %v795
    %v800 = vmul.f32 %v664, %v795
    %v801 = vmul.f32 %v665, %v795
    %v802 = vmul.f32 %v666, %v795
    %v803 = vmul.f32 %v667, %v795
    %v804 = vmul.f32 %v668, %v795
    %v805 = vmul.f32 %v669, %v795
    %v806 = vmul.f32 %v670, %v795
    %v807 = vmul.f32 %v671, %v795
    %v808 = vmul.f32 %v672, %v795
    %v809 = vmul.f32 %v673, %v795
    %v810 = vmul.f32 %v674, %v795
    %v811 = vmul.f32 %v675, %v795
    %v812 = vlaneseq
    %v813 = vshrl.u32 %v812, 7
    %v814 = vsub.s32 2, %v813
    %v815 = vrot.slane %v791, %v814
    %v816 = vadd.f32 %v796, %v815
    %v817 = vadd.f32 %v797, %v815
    %v818 = vadd.f32 %v798, %v815
    %v819 = vadd.f32 %v799, %v815
    %v820 = vadd.f32 %v800, %v815
    %v821 = vadd.f32 %v801, %v815
    %v822 = vadd.f32 %v802, %v815
    %v823 = vadd.f32 %v803, %v815
    %v824 = vadd.f32 %v804, %v815
    %v825 = vadd.f32 %v805, %v815
    %v826 = vadd.f32 %v806, %v815
    %v827 = vadd.f32 %v807, %v815
    %v828 = vadd.f32 %v808, %v815
    %v829 = vadd.f32 %v809, %v815
    %v830 = vadd.f32 %v810, %v815
    %v831 = vadd.f32 %v811, %v815
    %v832 = vpack.c.bf16 %v817, %v816
    %v833 = vpack.c.bf16 %v819, %v818
    %v834 = vpack.c.bf16 %v821, %v820
    %v835 = vpack.c.bf16 %v823, %v822
    %v836 = vpack.c.bf16 %v825, %v824
    %v837 = vpack.c.bf16 %v827, %v826
    %v838 = vpack.c.bf16 %v829, %v828
    %v839 = vpack.c.bf16 %v831, %v830
    %s840 = scalar_lea.vmem [#allocation6], 128
    %v841 = vld [vmem:[%s840] sm:$0xff]
    %v842 = vld [vmem:[%s840 + $0x8] sm:$0xff]
    %v843 = vld [vmem:[%s840 + $0x10] sm:$0xff]
    %v844 = vld [vmem:[%s840 + $0x18] sm:$0xff]
    %v845 = vld [vmem:[%s840 + $0x20] sm:$0xff]
    %v846 = vld [vmem:[%s840 + $0x28] sm:$0xff]
    %v847 = vld [vmem:[%s840 + $0x30] sm:$0xff]
    %v848 = vld [vmem:[%s840 + $0x38] sm:$0xff]
    %v849 = vld [vmem:[%s840 + $0x40] sm:$0xff]
    %v850 = vld [vmem:[%s840 + $0x48] sm:$0xff]
    %v851 = vld [vmem:[%s840 + $0x50] sm:$0xff]
    %v852 = vld [vmem:[%s840 + $0x58] sm:$0xff]
    %v853 = vld [vmem:[%s840 + $0x60] sm:$0xff]
    %v854 = vld [vmem:[%s840 + $0x68] sm:$0xff]
    %v855 = vld [vmem:[%s840 + $0x70] sm:$0xff]
    %v856 = vld [vmem:[%s840 + $0x78] sm:$0xff]
    %v873 = vunpack.c.l.b16 %v841
    %v874 = vunpack.c.h.b16 %v841
    %v875 = vunpack.c.l.b16 %v842
    %v876 = vunpack.c.h.b16 %v842
    %v877 = vunpack.c.l.b16 %v843
    %v878 = vunpack.c.h.b16 %v843
    %v879 = vunpack.c.l.b16 %v844
    %v880 = vunpack.c.h.b16 %v844
    %v881 = vunpack.c.l.b16 %v845
    %v882 = vunpack.c.h.b16 %v845
    %v883 = vunpack.c.l.b16 %v846
    %v884 = vunpack.c.h.b16 %v846
    %v885 = vunpack.c.l.b16 %v847
    %v886 = vunpack.c.h.b16 %v847
    %v887 = vunpack.c.l.b16 %v848
    %v888 = vunpack.c.h.b16 %v848
    %v889 = vunpack.c.l.b16 %v849
    %v890 = vunpack.c.h.b16 %v849
    %v891 = vunpack.c.l.b16 %v850
    %v892 = vunpack.c.h.b16 %v850
    %v893 = vunpack.c.l.b16 %v851
    %v894 = vunpack.c.h.b16 %v851
    %v895 = vunpack.c.l.b16 %v852
    %v896 = vunpack.c.h.b16 %v852
    %v897 = vunpack.c.l.b16 %v853
    %v898 = vunpack.c.h.b16 %v853
    %v899 = vunpack.c.l.b16 %v854
    %v900 = vunpack.c.h.b16 %v854
    %v901 = vunpack.c.l.b16 %v855
    %v902 = vunpack.c.h.b16 %v855
    %v903 = vunpack.c.l.b16 %v856
    %v904 = vunpack.c.h.b16 %v856
    %v905 = vpack.c.b16 %v875, %v873
    %v906 = vpack.c.b16 %v876, %v874
    %v907 = vpack.c.b16 %v879, %v877
    %v908 = vpack.c.b16 %v880, %v878
    %v909 = vpack.c.b16 %v883, %v881
    %v910 = vpack.c.b16 %v884, %v882
    %v911 = vpack.c.b16 %v887, %v885
    %v912 = vpack.c.b16 %v888, %v886
    %v913 = vpack.c.b16 %v891, %v889
    %v914 = vpack.c.b16 %v892, %v890
    %v915 = vpack.c.b16 %v895, %v893
    %v916 = vpack.c.b16 %v896, %v894
    %v917 = vpack.c.b16 %v899, %v897
    %v918 = vpack.c.b16 %v900, %v898
    %v919 = vpack.c.b16 %v903, %v901
    %v920 = vpack.c.b16 %v904, %v902
    %937 = vmatprep.subr.bf16.mxu0 %v906
    %938 = vmatpush1.bf16.msra.mxu0 %v905
    %939 = vmatprep.subr.bf16.mxu0 %v908
    %940 = vmatpush1.bf16.msra.mxu0 %v907
    %941 = vmatprep.subr.bf16.mxu0 %v910
    %942 = vmatpush1.bf16.msra.mxu0 %v909
    %943 = vmatprep.subr.bf16.mxu0 %v912
    %944 = vmatpush1.bf16.msra.mxu0 %v911
    %945 = vmatprep.subr.bf16.mxu0 %v914
    %946 = vmatpush1.bf16.msra.mxu0 %v913
    %947 = vmatprep.subr.bf16.mxu0 %v916
    %948 = vmatpush1.bf16.msra.mxu0 %v915
    %949 = vmatprep.subr.bf16.mxu0 %v918
    %950 = vmatpush1.bf16.msra.mxu0 %v917
    %951 = vmatprep.subr.bf16.mxu0 %v920
    %952 = vmatpush1.bf16.msra.mxu0 %v919
    %953 = vmatprep.subr.bf16.mxu0 0
    %954 = vmatpush1.bf16.msra.mxu0 0
    %955 = vmatprep.subr.bf16.mxu0 0
    %956 = vmatpush1.bf16.msra.mxu0 0
    %957 = vmatprep.subr.bf16.mxu0 0
    %958 = vmatpush1.bf16.msra.mxu0 0
    %959 = vmatprep.subr.bf16.mxu0 0
    %960 = vmatpush1.bf16.msra.mxu0 0
    %961 = vmatprep.subr.bf16.mxu0 0
    %962 = vmatpush1.bf16.msra.mxu0 0
    %963 = vmatprep.subr.bf16.mxu0 0
    %964 = vmatpush1.bf16.msra.mxu0 0
    %965 = vmatprep.subr.bf16.mxu0 0
    %966 = vmatpush1.bf16.msra.mxu0 0
    %967 = vmatprep.subr.bf16.mxu0 0
    %968 = vmatpush1.bf16.msra.mxu0 0
    %969 = vmatprep.mubr.bf16.mxu0 0
    %970 = vmatmul.mubr.bf16.gmra.mrb[0].mxu0 %v832
    %v971 = vpop.f32.mrb[0].mxu0
    %v972 = vadd.f32 0.0, %v971
    %v973 = vpop.f32.mrb[0].mxu0
    %v974 = vadd.f32 0.0, %v973
    %v975 = vpop.f32.mrb[0].mxu0
    %v976 = vadd.f32 0.0, %v975
    %v977 = vpop.f32.mrb[0].mxu0
    %v978 = vadd.f32 0.0, %v977
    %979 = vmatprep.mubr.bf16.mxu0 0
    %980 = vmatmul.mubr.bf16.gmra.mrb[0].mxu0 %v833
    %v981 = vpop.f32.mrb[0].mxu0
    %v982 = vadd.f32 0.0, %v981
    %v983 = vpop.f32.mrb[0].mxu0
    %v984 = vadd.f32 0.0, %v983
    %v985 = vpop.f32.mrb[0].mxu0
    %v986 = vadd.f32 0.0, %v985
    %v987 = vpop.f32.mrb[0].mxu0
    %v988 = vadd.f32 0.0, %v987
    %989 = vmatprep.mubr.bf16.mxu0 0
    %990 = vmatmul.mubr.bf16.gmra.mrb[0].mxu0 %v834
    %v991 = vpop.f32.mrb[0].mxu0
    %v992 = vadd.f32 0.0, %v991
    %v993 = vpop.f32.mrb[0].mxu0
    %v994 = vadd.f32 0.0, %v993
    %v995 = vpop.f32.mrb[0].mxu0
    %v996 = vadd.f32 0.0, %v995
    %v997 = vpop.f32.mrb[0].mxu0
    %v998 = vadd.f32 0.0, %v997
    %999 = vmatprep.mubr.bf16.mxu0 0
    %1000 = vmatmul.mubr.bf16.gmra.mrb[0].mxu0 %v835
    %v1001 = vpop.f32.mrb[0].mxu0
    %v1002 = vadd.f32 0.0, %v1001
    %v1003 = vpop.f32.mrb[0].mxu0
    %v1004 = vadd.f32 0.0, %v1003
    %v1005 = vpop.f32.mrb[0].mxu0
    %v1006 = vadd.f32 0.0, %v1005
    %v1007 = vpop.f32.mrb[0].mxu0
    %v1008 = vadd.f32 0.0, %v1007
    %1009 = vmatprep.mubr.bf16.mxu0 0
    %1010 = vmatmul.mubr.bf16.gmra.mrb[0].mxu0 %v836
    %v1011 = vpop.f32.mrb[0].mxu0
    %v1012 = vadd.f32 0.0, %v1011
    %v1013 = vpop.f32.mrb[0].mxu0
    %v1014 = vadd.f32 0.0, %v1013
    %v1015 = vpop.f32.mrb[0].mxu0
    %v1016 = vadd.f32 0.0, %v1015
    %v1017 = vpop.f32.mrb[0].mxu0
    %v1018 = vadd.f32 0.0, %v1017
    %1019 = vmatprep.mubr.bf16.mxu0 0
    %1020 = vmatmul.mubr.bf16.gmra.mrb[0].mxu0 %v837
    %v1021 = vpop.f32.mrb[0].mxu0
    %v1022 = vadd.f32 0.0, %v1021
    %v1023 = vpop.f32.mrb[0].mxu0
    %v1024 = vadd.f32 0.0, %v1023
    %v1025 = vpop.f32.mrb[0].mxu0
    %v1026 = vadd.f32 0.0, %v1025
    %v1027 = vpop.f32.mrb[0].mxu0
    %v1028 = vadd.f32 0.0, %v1027
    %1029 = vmatprep.mubr.bf16.mxu0 0
    %1030 = vmatmul.mubr.bf16.gmra.mrb[0].mxu0 %v838
    %v1031 = vpop.f32.mrb[0].mxu0
    %v1032 = vadd.f32 0.0, %v1031
    %v1033 = vpop.f32.mrb[0].mxu0
    %v1034 = vadd.f32 0.0, %v1033
    %v1035 = vpop.f32.mrb[0].mxu0
    %v1036 = vadd.f32 0.0, %v1035
    %v1037 = vpop.f32.mrb[0].mxu0
    %v1038 = vadd.f32 0.0, %v1037
    %1039 = vmatprep.mubr.bf16.mxu0 0
    %1040 = vmatmul.mubr.bf16.gmra.mrb[0].mxu0 %v839
    %v1041 = vpop.f32.mrb[0].mxu0
    %v1042 = vadd.f32 0.0, %v1041
    %v1043 = vpop.f32.mrb[0].mxu0
    %v1044 = vadd.f32 0.0, %v1043
    %v1045 = vpop.f32.mrb[0].mxu0
    %v1046 = vadd.f32 0.0, %v1045
    %v1047 = vpop.f32.mrb[0].mxu0
    %v1048 = vadd.f32 0.0, %v1047
    %1049 = vdwg.mxu0
    %v1050 = vpack.c.bf16 %v976, %v972
    %v1051 = vpack.c.bf16 %v986, %v982
    %v1052 = vpack.c.bf16 %v996, %v992
    %v1053 = vpack.c.bf16 %v1006, %v1002
    %v1054 = vpack.c.bf16 %v1016, %v1012
    %v1055 = vpack.c.bf16 %v1026, %v1022
    %v1056 = vpack.c.bf16 %v1036, %v1032
    %v1057 = vpack.c.bf16 %v1046, %v1042
    %v1058 = vlaneseq
    %v1059 = vshrl.u32 %v1058, 7
    %v1060 = vsub.s32 3, %v1059
    %v1061 = vrot.slane %v126, %v1060
    %1062 = vmatprep.subr.bf16.mxu0 0
    %1063 = vmatpush1.bf16.msra.mxu0 %v1050
    %1064 = vmatprep.subr.bf16.mxu0 0
    %1065 = vmatpush1.bf16.msra.mxu0 %v1051
    %1066 = vmatprep.subr.bf16.mxu0 0
    %1067 = vmatpush1.bf16.msra.mxu0 %v1052
    %1068 = vmatprep.subr.bf16.mxu0 0
    %1069 = vmatpush1.bf16.msra.mxu0 %v1053
    %1070 = vmatprep.subr.bf16.mxu0 0
    %1071 = vmatpush1.bf16.msra.mxu0 %v1054
    %1072 = vmatprep.subr.bf16.mxu0 0
    %1073 = vmatpush1.bf16.msra.mxu0 %v1055
    %1074 = vmatprep.subr.bf16.mxu0 0
    %1075 = vmatpush1.bf16.msra.mxu0 %v1056
    %1076 = vmatprep.subr.bf16.mxu0 0
    %1077 = vmatpush1.bf16.msra.mxu0 %v1057
    %1078 = vmatprep.subr.bf16.mxu0 0
    %1079 = vmatpush1.bf16.msra.mxu0 0
    %1080 = vmatprep.subr.bf16.mxu0 0
    %1081 = vmatpush1.bf16.msra.mxu0 0
    %1082 = vmatprep.subr.bf16.mxu0 0
    %1083 = vmatpush1.bf16.msra.mxu0 0
    %1084 = vmatprep.subr.bf16.mxu0 0
    %1085 = vmatpush1.bf16.msra.mxu0 0
    %1086 = vmatprep.subr.bf16.mxu0 0
    %1087 = vmatpush1.bf16.msra.mxu0 0
    %1088 = vmatprep.subr.bf16.mxu0 0
    %1089 = vmatpush1.bf16.msra.mxu0 0
    %1090 = vmatprep.subr.bf16.mxu0 0
    %1091 = vmatpush1.bf16.msra.mxu0 0
    %1092 = vmatprep.subr.bf16.mxu0 0
    %1093 = vmatpush1.bf16.msra.mxu0 0
    %1094 = vmatprep.mubr.bf16.mxu0 0
    %1095 = vmatmul.mubr.bf16.gmra.mrb[0].mxu0 %v495
    %v1096 = vpop.f32.mrb[0].mxu0
    %v1097 = vadd.f32 %v1061, %v1096
    %v1098 = vpop.f32.mrb[0].mxu0
    %v1099 = vpop.f32.mrb[0].mxu0
    %v1100 = vadd.f32 %v1061, %v1099
    %v1101 = vpop.f32.mrb[0].mxu0
    %1102 = vmatprep.mubr.bf16.mxu0 0
    %1103 = vmatmul.mubr.bf16.gmra.mrb[0].mxu0 %v496
    %v1104 = vpop.f32.mrb[0].mxu0
    %v1105 = vadd.f32 %v1061, %v1104
    %v1106 = vpop.f32.mrb[0].mxu0
    %v1107 = vpop.f32.mrb[0].mxu0
    %v1108 = vadd.f32 %v1061, %v1107
    %v1109 = vpop.f32.mrb[0].mxu0
    %1110 = vmatprep.mubr.bf16.mxu0 0
    %1111 = vmatmul.mubr.bf16.gmra.mrb[0].mxu0 %v497
    %v1112 = vpop.f32.mrb[0].mxu0
    %v1113 = vadd.f32 %v1061, %v1112
    %v1114 = vpop.f32.mrb[0].mxu0
    %v1115 = vpop.f32.mrb[0].mxu0
    %v1116 = vadd.f32 %v1061, %v1115
    %v1117 = vpop.f32.mrb[0].mxu0
    %1118 = vmatprep.mubr.bf16.mxu0 0
    %1119 = vmatmul.mubr.bf16.gmra.mrb[0].mxu0 %v498
    %v1120 = vpop.f32.mrb[0].mxu0
    %v1121 = vadd.f32 %v1061, %v1120
    %v1122 = vpop.f32.mrb[0].mxu0
    %v1123 = vpop.f32.mrb[0].mxu0
    %v1124 = vadd.f32 %v1061, %v1123
    %v1125 = vpop.f32.mrb[0].mxu0
    %1126 = vmatprep.mubr.bf16.mxu0 0
    %1127 = vmatmul.mubr.bf16.gmra.mrb[0].mxu0 %v499
    %v1128 = vpop.f32.mrb[0].mxu0
    %v1129 = vadd.f32 %v1061, %v1128
    %v1130 = vpop.f32.mrb[0].mxu0
    %v1131 = vpop.f32.mrb[0].mxu0
    %v1132 = vadd.f32 %v1061, %v1131
    %v1133 = vpop.f32.mrb[0].mxu0
    %1134 = vmatprep.mubr.bf16.mxu0 0
    %1135 = vmatmul.mubr.bf16.gmra.mrb[0].mxu0 %v500
    %v1136 = vpop.f32.mrb[0].mxu0
    %v1137 = vadd.f32 %v1061, %v1136
    %v1138 = vpop.f32.mrb[0].mxu0
    %v1139 = vpop.f32.mrb[0].mxu0
    %v1140 = vadd.f32 %v1061, %v1139
    %v1141 = vpop.f32.mrb[0].mxu0
    %1142 = vmatprep.mubr.bf16.mxu0 0
    %1143 = vmatmul.mubr.bf16.gmra.mrb[0].mxu0 %v501
    %v1144 = vpop.f32.mrb[0].mxu0
    %v1145 = vadd.f32 %v1061, %v1144
    %v1146 = vpop.f32.mrb[0].mxu0
    %v1147 = vpop.f32.mrb[0].mxu0
    %v1148 = vadd.f32 %v1061, %v1147
    %v1149 = vpop.f32.mrb[0].mxu0
    %1150 = vmatprep.mubr.bf16.mxu0 0
    %1151 = vmatmul.mubr.bf16.gmra.mrb[0].mxu0 %v502
    %v1152 = vpop.f32.mrb[0].mxu0
    %v1153 = vadd.f32 %v1061, %v1152
    %v1154 = vpop.f32.mrb[0].mxu0
    %v1155 = vpop.f32.mrb[0].mxu0
    %v1156 = vadd.f32 %v1061, %v1155
    %v1157 = vpop.f32.mrb[0].mxu0
    %1158 = vdwg.mxu0
    %v1159 = vmax.f32 %v1097, 0.0
    %v1160 = vmax.f32 %v1100, 0.0
    %v1161 = vmax.f32 %v1105, 0.0
    %v1162 = vmax.f32 %v1108, 0.0
    %v1163 = vmax.f32 %v1113, 0.0
    %v1164 = vmax.f32 %v1116, 0.0
    %v1165 = vmax.f32 %v1121, 0.0
    %v1166 = vmax.f32 %v1124, 0.0
    %v1167 = vmax.f32 %v1129, 0.0
    %v1168 = vmax.f32 %v1132, 0.0
    %v1169 = vmax.f32 %v1137, 0.0
    %v1170 = vmax.f32 %v1140, 0.0
    %v1171 = vmax.f32 %v1145, 0.0
    %v1172 = vmax.f32 %v1148, 0.0
    %v1173 = vmax.f32 %v1153, 0.0
    %v1174 = vmax.f32 %v1156, 0.0
    %v1175 = vlaneseq
    %v1176 = vshrl.u32 %v1175, 7
    %v1177 = vsub.s32 3, %v1176
    %v1178 = vrot.slane %v127, %v1177
    %v1179 = vadd.f32 %v974, %v1178
    %v1180 = vadd.f32 %v978, %v1178
    %v1181 = vadd.f32 %v984, %v1178
    %v1182 = vadd.f32 %v988, %v1178
    %v1183 = vadd.f32 %v994, %v1178
    %v1184 = vadd.f32 %v998, %v1178
    %v1185 = vadd.f32 %v1004, %v1178
    %v1186 = vadd.f32 %v1008, %v1178
    %v1187 = vadd.f32 %v1014, %v1178
    %v1188 = vadd.f32 %v1018, %v1178
    %v1189 = vadd.f32 %v1024, %v1178
    %v1190 = vadd.f32 %v1028, %v1178
    %v1191 = vadd.f32 %v1034, %v1178
    %v1192 = vadd.f32 %v1038, %v1178
    %v1193 = vadd.f32 %v1044, %v1178
    %v1194 = vadd.f32 %v1048, %v1178
    %v1195 = vmax.f32 %v1179, 0.0
    %v1196 = vmax.f32 %v1180, 0.0
    %v1197 = vmax.f32 %v1181, 0.0
    %v1198 = vmax.f32 %v1182, 0.0
    %v1199 = vmax.f32 %v1183, 0.0
    %v1200 = vmax.f32 %v1184, 0.0
    %v1201 = vmax.f32 %v1185, 0.0
    %v1202 = vmax.f32 %v1186, 0.0
    %v1203 = vmax.f32 %v1187, 0.0
    %v1204 = vmax.f32 %v1188, 0.0
    %v1205 = vmax.f32 %v1189, 0.0
    %v1206 = vmax.f32 %v1190, 0.0
    %v1207 = vmax.f32 %v1191, 0.0
    %v1208 = vmax.f32 %v1192, 0.0
    %v1209 = vmax.f32 %v1193, 0.0
    %v1210 = vmax.f32 %v1194, 0.0
    %v1211 = vadd.f32 %v1159, %v1195
    %v1212 = vadd.f32 %v1160, %v1196
    %v1213 = vadd.f32 %v1161, %v1197
    %v1214 = vadd.f32 %v1162, %v1198
    %v1215 = vadd.f32 %v1163, %v1199
    %v1216 = vadd.f32 %v1164, %v1200
    %v1217 = vadd.f32 %v1165, %v1201
    %v1218 = vadd.f32 %v1166, %v1202
    %v1219 = vadd.f32 %v1167, %v1203
    %v1220 = vadd.f32 %v1168, %v1204
    %v1221 = vadd.f32 %v1169, %v1205
    %v1222 = vadd.f32 %v1170, %v1206
    %v1223 = vadd.f32 %v1171, %v1207
    %v1224 = vadd.f32 %v1172, %v1208
    %v1225 = vadd.f32 %v1173, %v1209
    %v1226 = vadd.f32 %v1174, %v1210
    %v1227 = vmul.f32 %v1211, %v178
    %v1228 = vmul.f32 %v1212, %v179
    %v1229 = vmul.f32 %v1213, %v180
    %v1230 = vmul.f32 %v1214, %v181
    %v1231 = vmul.f32 %v1215, %v182
    %v1232 = vmul.f32 %v1216, %v183
    %v1233 = vmul.f32 %v1217, %v184
    %v1234 = vmul.f32 %v1218, %v185
    %v1235 = vmul.f32 %v1219, %v186
    %v1236 = vmul.f32 %v1220, %v187
    %v1237 = vmul.f32 %v1221, %v188
    %v1238 = vmul.f32 %v1222, %v189
    %v1239 = vmul.f32 %v1223, %v190
    %v1240 = vmul.f32 %v1224, %v191
    %v1241 = vmul.f32 %v1225, %v192
    %v1242 = vmul.f32 %v1226, %v193
    %v1243 = vadd.f32 %v1227, %v1228
    %v1244 = vadd.f32 %v1243, %v1229
    %v1245 = vadd.f32 %v1244, %v1230
    %v1246 = vadd.f32 %v1245, %v1231
    %v1247 = vadd.f32 %v1246, %v1232
    %v1248 = vadd.f32 %v1247, %v1233
    %v1249 = vadd.f32 %v1248, %v1234
    %v1250 = vadd.f32 %v1249, %v1235
    %v1251 = vadd.f32 %v1250, %v1236
    %v1252 = vadd.f32 %v1251, %v1237
    %v1253 = vadd.f32 %v1252, %v1238
    %v1254 = vadd.f32 %v1253, %v1239
    %v1255 = vadd.f32 %v1254, %v1240
    %v1256 = vadd.f32 %v1255, %v1241
    %v1257 = vadd.f32 %v1256, %v1242
    %v1258 = vrot.slane %v1257, 4
    %v1259 = vadd.f32 %v1257, %v1258
    %v1260 = vrot.slane %v1259, 2
    %v1261 = vadd.f32 %v1259, %v1260
    %v1262 = vrot.slane %v1261, 1
    %v1263 = vadd.f32 %v1261, %v1262
    %v1264 = vmul.f32 %v1263, 0.03125
    %v1265 = vsub.f32 %v1227, %v1264
    %v1266 = vsub.f32 %v1228, %v1264
    %v1267 = vsub.f32 %v1229, %v1264
    %v1268 = vsub.f32 %v1230, %v1264
    %v1269 = vsub.f32 %v1231, %v1264
    %v1270 = vsub.f32 %v1232, %v1264
    %v1271 = vsub.f32 %v1233, %v1264
    %v1272 = vsub.f32 %v1234, %v1264
    %v1273 = vsub.f32 %v1235, %v1264
    %v1274 = vsub.f32 %v1236, %v1264
    %v1275 = vsub.f32 %v1237, %v1264
    %v1276 = vsub.f32 %v1238, %v1264
    %v1277 = vsub.f32 %v1239, %v1264
    %v1278 = vsub.f32 %v1240, %v1264
    %v1279 = vsub.f32 %v1241, %v1264
    %v1280 = vsub.f32 %v1242, %v1264
    %v1281 = vmul.f32 %v1265, %v178
    %v1282 = vmul.f32 %v1266, %v179
    %v1283 = vmul.f32 %v1267, %v180
    %v1284 = vmul.f32 %v1268, %v181
    %v1285 = vmul.f32 %v1269, %v182
    %v1286 = vmul.f32 %v1270, %v183
    %v1287 = vmul.f32 %v1271, %v184
    %v1288 = vmul.f32 %v1272, %v185
    %v1289 = vmul.f32 %v1273, %v186
    %v1290 = vmul.f32 %v1274, %v187
    %v1291 = vmul.f32 %v1275, %v188
    %v1292 = vmul.f32 %v1276, %v189
    %v1293 = vmul.f32 %v1277, %v190
    %v1294 = vmul.f32 %v1278, %v191
    %v1295 = vmul.f32 %v1279, %v192
    %v1296 = vmul.f32 %v1280, %v193
    %v1297 = vmul.f32 %v1281, %v1281
    %v1298 = vmul.f32 %v1282, %v1282
    %v1299 = vmul.f32 %v1283, %v1283
    %v1300 = vmul.f32 %v1284, %v1284
    %v1301 = vmul.f32 %v1285, %v1285
    %v1302 = vmul.f32 %v1286, %v1286
    %v1303 = vmul.f32 %v1287, %v1287
    %v1304 = vmul.f32 %v1288, %v1288
    %v1305 = vmul.f32 %v1289, %v1289
    %v1306 = vmul.f32 %v1290, %v1290
    %v1307 = vmul.f32 %v1291, %v1291
    %v1308 = vmul.f32 %v1292, %v1292
    %v1309 = vmul.f32 %v1293, %v1293
    %v1310 = vmul.f32 %v1294, %v1294
    %v1311 = vmul.f32 %v1295, %v1295
    %v1312 = vmul.f32 %v1296, %v1296
    %v1313 = vadd.f32 %v1297, %v1298
    %v1314 = vadd.f32 %v1313, %v1299
    %v1315 = vadd.f32 %v1314, %v1300
    %v1316 = vadd.f32 %v1315, %v1301
    %v1317 = vadd.f32 %v1316, %v1302
    %v1318 = vadd.f32 %v1317, %v1303
    %v1319 = vadd.f32 %v1318, %v1304
    %v1320 = vadd.f32 %v1319, %v1305
    %v1321 = vadd.f32 %v1320, %v1306
    %v1322 = vadd.f32 %v1321, %v1307
    %v1323 = vadd.f32 %v1322, %v1308
    %v1324 = vadd.f32 %v1323, %v1309
    %v1325 = vadd.f32 %v1324, %v1310
    %v1326 = vadd.f32 %v1325, %v1311
    %v1327 = vadd.f32 %v1326, %v1312
    %v1328 = vrot.slane %v1327, 4
    %v1329 = vadd.f32 %v1327, %v1328
    %v1330 = vrot.slane %v1329, 2
    %v1331 = vadd.f32 %v1329, %v1330
    %v1332 = vrot.slane %v1331, 1
    %v1333 = vadd.f32 %v1331, %v1332
    %v1334 = vmul.f32 %v1333, 0.03125
    %v1335 = vadd.f32 %v1334, 1e-05
    %v1336 = vrsqrt.pop %v1335
    %v1337 = vmul.f32 %v126, %v1336
    %v1338 = vmul.f32 %v1264, %v1337
    %v1340 = vrot.slane %v1338, 7
    %v1342 = vsub.f32 %v126, %v1340
    %v1343 = vlaneseq
    %v1344 = vshrl.u32 %v1343, 7
    %v1345 = vsub.s32 4, %v1344
    %v1346 = vrot.slane %v1337, %v1345
    %v1347 = vmul.f32 %v1211, %v1346
    %v1348 = vmul.f32 %v1212, %v1346
    %v1349 = vmul.f32 %v1213, %v1346
    %v1350 = vmul.f32 %v1214, %v1346
    %v1351 = vmul.f32 %v1215, %v1346
    %v1352 = vmul.f32 %v1216, %v1346
    %v1353 = vmul.f32 %v1217, %v1346
    %v1354 = vmul.f32 %v1218, %v1346
    %v1355 = vmul.f32 %v1219, %v1346
    %v1356 = vmul.f32 %v1220, %v1346
    %v1357 = vmul.f32 %v1221, %v1346
    %v1358 = vmul.f32 %v1222, %v1346
    %v1359 = vmul.f32 %v1223, %v1346
    %v1360 = vmul.f32 %v1224, %v1346
    %v1361 = vmul.f32 %v1225, %v1346
    %v1362 = vmul.f32 %v1226, %v1346
    %v1363 = vlaneseq
    %v1364 = vshrl.u32 %v1363, 7
    %v1365 = vsub.s32 5, %v1364
    %v1366 = vrot.slane %v1342, %v1365
    %v1367 = vadd.f32 %v1347, %v1366
    %v1368 = vadd.f32 %v1348, %v1366
    %v1369 = vadd.f32 %v1349, %v1366
    %v1370 = vadd.f32 %v1350, %v1366
    %v1371 = vadd.f32 %v1351, %v1366
    %v1372 = vadd.f32 %v1352, %v1366
    %v1373 = vadd.f32 %v1353, %v1366
    %v1374 = vadd.f32 %v1354, %v1366
    %v1375 = vadd.f32 %v1355, %v1366
    %v1376 = vadd.f32 %v1356, %v1366
    %v1377 = vadd.f32 %v1357, %v1366
    %v1378 = vadd.f32 %v1358, %v1366
    %v1379 = vadd.f32 %v1359, %v1366
    %v1380 = vadd.f32 %v1360, %v1366
    %v1381 = vadd.f32 %v1361, %v1366
    %v1382 = vadd.f32 %v1362, %v1366
    %v1383 = vld [vmem:[%s2] sm:$0xf]
    %v1384 = vpack.c.bf16 %v1368, %v1367
    %v1385 = vpack.c.bf16 %v1370, %v1369
    %v1386 = vpack.c.bf16 %v1372, %v1371
    %v1387 = vpack.c.bf16 %v1374, %v1373
    %v1388 = vpack.c.bf16 %v1376, %v1375
    %v1389 = vpack.c.bf16 %v1378, %v1377
    %v1390 = vpack.c.bf16 %v1380, %v1379
    %v1391 = vpack.c.bf16 %v1382, %v1381
    %1392 = vmatprep.subr.bf16.mxu0 0
    %1393 = vmatpush1.bf16.msra.mxu0 %v1384
    %1394 = vmatprep.subr.bf16.mxu0 0
    %1395 = vmatpush1.bf16.msra.mxu0 %v1385
    %1396 = vmatprep.subr.bf16.mxu0 0
    %1397 = vmatpush1.bf16.msra.mxu0 %v1386
    %1398 = vmatprep.subr.bf16.mxu0 0
    %1399 = vmatpush1.bf16.msra.mxu0 %v1387
    %1400 = vmatprep.subr.bf16.mxu0 0
    %1401 = vmatpush1.bf16.msra.mxu0 %v1388
    %1402 = vmatprep.subr.bf16.mxu0 0
    %1403 = vmatpush1.bf16.msra.mxu0 %v1389
    %1404 = vmatprep.subr.bf16.mxu0 0
    %1405 = vmatpush1.bf16.msra.mxu0 %v1390
    %1406 = vmatprep.subr.bf16.mxu0 0
    %1407 = vmatpush1.bf16.msra.mxu0 %v1391
    %1408 = vmatprep.subr.bf16.mxu0 0
    %1409 = vmatpush1.bf16.msra.mxu0 0
    %1410 = vmatprep.subr.bf16.mxu0 0
    %1411 = vmatpush1.bf16.msra.mxu0 0
    %1412 = vmatprep.subr.bf16.mxu0 0
    %1413 = vmatpush1.bf16.msra.mxu0 0
    %1414 = vmatprep.subr.bf16.mxu0 0
    %1415 = vmatpush1.bf16.msra.mxu0 0
    %1416 = vmatprep.subr.bf16.mxu0 0
    %1417 = vmatpush1.bf16.msra.mxu0 0
    %1418 = vmatprep.subr.bf16.mxu0 0
    %1419 = vmatpush1.bf16.msra.mxu0 0
    %1420 = vmatprep.subr.bf16.mxu0 0
    %1421 = vmatpush1.bf16.msra.mxu0 0
    %1422 = vmatprep.subr.bf16.mxu0 0
    %1423 = vmatpush1.bf16.msra.mxu0 0
    %1424 = vmatprep.mubr.bf16.mxu0 0
    %1425 = vmatmul.mubr.bf16.gmra.mrb[0].mxu0 %v1383
    %v1426 = vpop.f32.mrb[0].mxu0
    %v1427 = vadd.f32 0.0, %v1426
    %v1428 = vpop.f32.mrb[0].mxu0
    %v1429 = vpop.f32.mrb[0].mxu0
    %v1430 = vpop.f32.mrb[0].mxu0
    %1431 = vdwg.mxu0
    %1432 = vst [vmem:[%s6] sm:$0xff] %v1427
    %v1433 = vpack.c.bf16 %v1427, %v1427
    %v1434 = vld [vmem:[#allocation7] sm:$0xf]
    %v1435 = vld [vmem:[#allocation7 + $0x4] sm:$0xf]
    %v1436 = vld [vmem:[#allocation7 + $0x8] sm:$0xf]
    %v1437 = vld [vmem:[#allocation7 + $0xc] sm:$0xf]
    %v1438 = vld [vmem:[#allocation7 + $0x10] sm:$0xf]
    %v1439 = vld [vmem:[#allocation7 + $0x14] sm:$0xf]
    %v1440 = vld [vmem:[#allocation7 + $0x18] sm:$0xf]
    %v1441 = vld [vmem:[#allocation7 + $0x1c] sm:$0xf]
    %v1442 = vld [vmem:[#allocation7 + $0x20] sm:$0xf]
    %v1443 = vld [vmem:[#allocation7 + $0x24] sm:$0xf]
    %v1444 = vld [vmem:[#allocation7 + $0x28] sm:$0xf]
    %v1445 = vld [vmem:[#allocation7 + $0x2c] sm:$0xf]
    %v1446 = vld [vmem:[#allocation7 + $0x30] sm:$0xf]
    %v1447 = vld [vmem:[#allocation7 + $0x34] sm:$0xf]
    %v1448 = vld [vmem:[#allocation7 + $0x38] sm:$0xf]
    %v1449 = vld [vmem:[#allocation7 + $0x3c] sm:$0xf]
    %v1450 = vlaneseq
    %v1451 = vshrl.u32 %v1450, 7
    %v1452 = vsub.s32 6, %v1451
    %v1453 = vrot.slane %v126, %v1452
    %v1470 = vunpack.c.l.b16 %v1434
    %v1471 = vunpack.c.l.b16 %v1435
    %v1472 = vunpack.c.l.b16 %v1436
    %v1473 = vunpack.c.l.b16 %v1437
    %v1474 = vunpack.c.l.b16 %v1438
    %v1475 = vunpack.c.l.b16 %v1439
    %v1476 = vunpack.c.l.b16 %v1440
    %v1477 = vunpack.c.l.b16 %v1441
    %v1478 = vunpack.c.l.b16 %v1442
    %v1479 = vunpack.c.l.b16 %v1443
    %v1480 = vunpack.c.l.b16 %v1444
    %v1481 = vunpack.c.l.b16 %v1445
    %v1482 = vunpack.c.l.b16 %v1446
    %v1483 = vunpack.c.l.b16 %v1447
    %v1484 = vunpack.c.l.b16 %v1448
    %v1485 = vunpack.c.l.b16 %v1449
    %v1486 = vpack.c.b16 %v1471, %v1470
    %v1487 = vpack.c.b16 %v1473, %v1472
    %v1488 = vpack.c.b16 %v1475, %v1474
    %v1489 = vpack.c.b16 %v1477, %v1476
    %v1490 = vpack.c.b16 %v1479, %v1478
    %v1491 = vpack.c.b16 %v1481, %v1480
    %v1492 = vpack.c.b16 %v1483, %v1482
    %v1493 = vpack.c.b16 %v1485, %v1484
    %1502 = vmatprep.subr.bf16.mxu0 0
    %1503 = vmatpush1.bf16.msra.mxu0 %v1486
    %1504 = vmatprep.subr.bf16.mxu0 0
    %1505 = vmatpush1.bf16.msra.mxu0 %v1487
    %1506 = vmatprep.subr.bf16.mxu0 0
    %1507 = vmatpush1.bf16.msra.mxu0 %v1488
    %1508 = vmatprep.subr.bf16.mxu0 0
    %1509 = vmatpush1.bf16.msra.mxu0 %v1489
    %1510 = vmatprep.subr.bf16.mxu0 0
    %1511 = vmatpush1.bf16.msra.mxu0 %v1490
    %1512 = vmatprep.subr.bf16.mxu0 0
    %1513 = vmatpush1.bf16.msra.mxu0 %v1491
    %1514 = vmatprep.subr.bf16.mxu0 0
    %1515 = vmatpush1.bf16.msra.mxu0 %v1492
    %1516 = vmatprep.subr.bf16.mxu0 0
    %1517 = vmatpush1.bf16.msra.mxu0 %v1493
    %1518 = vmatprep.subr.bf16.mxu0 0
    %1519 = vmatpush1.bf16.msra.mxu0 0
    %1520 = vmatprep.subr.bf16.mxu0 0
    %1521 = vmatpush1.bf16.msra.mxu0 0
    %1522 = vmatprep.subr.bf16.mxu0 0
    %1523 = vmatpush1.bf16.msra.mxu0 0
    %1524 = vmatprep.subr.bf16.mxu0 0
    %1525 = vmatpush1.bf16.msra.mxu0 0
    %1526 = vmatprep.subr.bf16.mxu0 0
    %1527 = vmatpush1.bf16.msra.mxu0 0
    %1528 = vmatprep.subr.bf16.mxu0 0
    %1529 = vmatpush1.bf16.msra.mxu0 0
    %1530 = vmatprep.subr.bf16.mxu0 0
    %1531 = vmatpush1.bf16.msra.mxu0 0
    %1532 = vmatprep.subr.bf16.mxu0 0
    %1533 = vmatpush1.bf16.msra.mxu0 0
    %1534 = vmatprep.mubr.bf16.mxu0 0
    %1535 = vmatmul.mubr.bf16.gmra.mrb[0].mxu0 %v1433
    %v1536 = vpop.f32.mrb[0].mxu0
    %v1537 = vadd.f32 %v1453, %v1536
    %v1538 = vpop.f32.mrb[0].mxu0
    %v1539 = vpop.f32.mrb[0].mxu0
    %v1540 = vpop.f32.mrb[0].mxu0
    %1541 = vdwg.mxu0
    %v1542 = vpack.c.bf16 %v1537, %v1537
    %s1543 = scalar_lea.vmem [#allocation7], 64
    %v1544 = vld [vmem:[%s1543] sm:$0xf]
    %v1545 = vld [vmem:[%s1543 + $0x4] sm:$0xf]
    %v1546 = vld [vmem:[%s1543 + $0x8] sm:$0xf]
    %v1547 = vld [vmem:[%s1543 + $0xc] sm:$0xf]
    %v1548 = vld [vmem:[%s1543 + $0x10] sm:$0xf]
    %v1549 = vld [vmem:[%s1543 + $0x14] sm:$0xf]
    %v1550 = vld [vmem:[%s1543 + $0x18] sm:$0xf]
    %v1551 = vld [vmem:[%s1543 + $0x1c] sm:$0xf]
    %v1552 = vld [vmem:[%s1543 + $0x20] sm:$0xf]
    %v1553 = vld [vmem:[%s1543 + $0x24] sm:$0xf]
    %v1554 = vld [vmem:[%s1543 + $0x28] sm:$0xf]
    %v1555 = vld [vmem:[%s1543 + $0x2c] sm:$0xf]
    %v1556 = vld [vmem:[%s1543 + $0x30] sm:$0xf]
    %v1557 = vld [vmem:[%s1543 + $0x34] sm:$0xf]
    %v1558 = vld [vmem:[%s1543 + $0x38] sm:$0xf]
    %v1559 = vld [vmem:[%s1543 + $0x3c] sm:$0xf]
    %v1560 = vlaneseq
    %v1561 = vshrl.u32 %v1560, 7
    %v1562 = vsub.s32 7, %v1561
    %v1563 = vrot.slane %v126, %v1562
    %v1580 = vunpack.c.l.b16 %v1544
    %v1581 = vunpack.c.l.b16 %v1545
    %v1582 = vunpack.c.l.b16 %v1546
    %v1583 = vunpack.c.l.b16 %v1547
    %v1584 = vunpack.c.l.b16 %v1548
    %v1585 = vunpack.c.l.b16 %v1549
    %v1586 = vunpack.c.l.b16 %v1550
    %v1587 = vunpack.c.l.b16 %v1551
    %v1588 = vunpack.c.l.b16 %v1552
    %v1589 = vunpack.c.l.b16 %v1553
    %v1590 = vunpack.c.l.b16 %v1554
    %v1591 = vunpack.c.l.b16 %v1555
    %v1592 = vunpack.c.l.b16 %v1556
    %v1593 = vunpack.c.l.b16 %v1557
    %v1594 = vunpack.c.l.b16 %v1558
    %v1595 = vunpack.c.l.b16 %v1559
    %v1596 = vpack.c.b16 %v1581, %v1580
    %v1597 = vpack.c.b16 %v1583, %v1582
    %v1598 = vpack.c.b16 %v1585, %v1584
    %v1599 = vpack.c.b16 %v1587, %v1586
    %v1600 = vpack.c.b16 %v1589, %v1588
    %v1601 = vpack.c.b16 %v1591, %v1590
    %v1602 = vpack.c.b16 %v1593, %v1592
    %v1603 = vpack.c.b16 %v1595, %v1594
    %1612 = vmatprep.subr.bf16.mxu0 0
    %1613 = vmatpush1.bf16.msra.mxu0 %v1596
    %1614 = vmatprep.subr.bf16.mxu0 0
    %1615 = vmatpush1.bf16.msra.mxu0 %v1597
    %1616 = vmatprep.subr.bf16.mxu0 0
    %1617 = vmatpush1.bf16.msra.mxu0 %v1598
    %1618 = vmatprep.subr.bf16.mxu0 0
    %1619 = vmatpush1.bf16.msra.mxu0 %v1599
    %1620 = vmatprep.subr.bf16.mxu0 0
    %1621 = vmatpush1.bf16.msra.mxu0 %v1600
    %1622 = vmatprep.subr.bf16.mxu0 0
    %1623 = vmatpush1.bf16.msra.mxu0 %v1601
    %1624 = vmatprep.subr.bf16.mxu0 0
    %1625 = vmatpush1.bf16.msra.mxu0 %v1602
    %1626 = vmatprep.subr.bf16.mxu0 0
    %1627 = vmatpush1.bf16.msra.mxu0 %v1603
    %1628 = vmatprep.subr.bf16.mxu0 0
    %1629 = vmatpush1.bf16.msra.mxu0 0
    %1630 = vmatprep.subr.bf16.mxu0 0
    %1631 = vmatpush1.bf16.msra.mxu0 0
    %1632 = vmatprep.subr.bf16.mxu0 0
    %1633 = vmatpush1.bf16.msra.mxu0 0
    %1634 = vmatprep.subr.bf16.mxu0 0
    %1635 = vmatpush1.bf16.msra.mxu0 0
    %1636 = vmatprep.subr.bf16.mxu0 0
    %1637 = vmatpush1.bf16.msra.mxu0 0
    %1638 = vmatprep.subr.bf16.mxu0 0
    %1639 = vmatpush1.bf16.msra.mxu0 0
    %1640 = vmatprep.subr.bf16.mxu0 0
    %1641 = vmatpush1.bf16.msra.mxu0 0
    %1642 = vmatprep.subr.bf16.mxu0 0
    %1643 = vmatpush1.bf16.msra.mxu0 0
    %1644 = vmatprep.mubr.bf16.mxu0 0
    %1645 = vmatmul.mubr.bf16.gmra.mrb[0].mxu0 %v1542
    %v1646 = vpop.f32.mrb[0].mxu0
    %v1647 = vadd.f32 %v1563, %v1646
    %v1648 = vpop.f32.mrb[0].mxu0
    %v1649 = vpop.f32.mrb[0].mxu0
    %v1650 = vpop.f32.mrb[0].mxu0
    %1651 = vdwg.mxu0
    %v1652 = vmax.f32 %v1647, 0.0
    %v1653 = vpack.c.bf16 %v1652, %v1652
    %s1654 = scalar_lea.vmem [#allocation7], 128
    %v1655 = vld [vmem:[%s1654] sm:$0xf]
    %v1656 = vld [vmem:[%s1654 + $0x4] sm:$0xf]
    %v1657 = vld [vmem:[%s1654 + $0x8] sm:$0xf]
    %v1658 = vld [vmem:[%s1654 + $0xc] sm:$0xf]
    %v1659 = vld [vmem:[%s1654 + $0x10] sm:$0xf]
    %v1660 = vld [vmem:[%s1654 + $0x14] sm:$0xf]
    %v1661 = vld [vmem:[%s1654 + $0x18] sm:$0xf]
    %v1662 = vld [vmem:[%s1654 + $0x1c] sm:$0xf]
    %v1663 = vld [vmem:[%s1654 + $0x20] sm:$0xf]
    %v1664 = vld [vmem:[%s1654 + $0x24] sm:$0xf]
    %v1665 = vld [vmem:[%s1654 + $0x28] sm:$0xf]
    %v1666 = vld [vmem:[%s1654 + $0x2c] sm:$0xf]
    %v1667 = vld [vmem:[%s1654 + $0x30] sm:$0xf]
    %v1668 = vld [vmem:[%s1654 + $0x34] sm:$0xf]
    %v1669 = vld [vmem:[%s1654 + $0x38] sm:$0xf]
    %v1670 = vld [vmem:[%s1654 + $0x3c] sm:$0xf]
    %v1671 = vlaneseq
    %v1672 = vshrl.u32 %v1671, 7
    %v1673 = vsub.s32 0, %v1672
    %v1674 = vrot.slane %v128, %v1673
    %v1691 = vunpack.c.l.b16 %v1655
    %v1692 = vunpack.c.l.b16 %v1656
    %v1693 = vunpack.c.l.b16 %v1657
    %v1694 = vunpack.c.l.b16 %v1658
    %v1695 = vunpack.c.l.b16 %v1659
    %v1696 = vunpack.c.l.b16 %v1660
    %v1697 = vunpack.c.l.b16 %v1661
    %v1698 = vunpack.c.l.b16 %v1662
    %v1699 = vunpack.c.l.b16 %v1663
    %v1700 = vunpack.c.l.b16 %v1664
    %v1701 = vunpack.c.l.b16 %v1665
    %v1702 = vunpack.c.l.b16 %v1666
    %v1703 = vunpack.c.l.b16 %v1667
    %v1704 = vunpack.c.l.b16 %v1668
    %v1705 = vunpack.c.l.b16 %v1669
    %v1706 = vunpack.c.l.b16 %v1670
    %v1707 = vpack.c.b16 %v1692, %v1691
    %v1708 = vpack.c.b16 %v1694, %v1693
    %v1709 = vpack.c.b16 %v1696, %v1695
    %v1710 = vpack.c.b16 %v1698, %v1697
    %v1711 = vpack.c.b16 %v1700, %v1699
    %v1712 = vpack.c.b16 %v1702, %v1701
    %v1713 = vpack.c.b16 %v1704, %v1703
    %v1714 = vpack.c.b16 %v1706, %v1705
    %1723 = vmatprep.subr.bf16.mxu0 0
    %1724 = vmatpush1.bf16.msra.mxu0 %v1707
    %1725 = vmatprep.subr.bf16.mxu0 0
    %1726 = vmatpush1.bf16.msra.mxu0 %v1708
    %1727 = vmatprep.subr.bf16.mxu0 0
    %1728 = vmatpush1.bf16.msra.mxu0 %v1709
    %1729 = vmatprep.subr.bf16.mxu0 0
    %1730 = vmatpush1.bf16.msra.mxu0 %v1710
    %1731 = vmatprep.subr.bf16.mxu0 0
    %1732 = vmatpush1.bf16.msra.mxu0 %v1711
    %1733 = vmatprep.subr.bf16.mxu0 0
    %1734 = vmatpush1.bf16.msra.mxu0 %v1712
    %1735 = vmatprep.subr.bf16.mxu0 0
    %1736 = vmatpush1.bf16.msra.mxu0 %v1713
    %1737 = vmatprep.subr.bf16.mxu0 0
    %1738 = vmatpush1.bf16.msra.mxu0 %v1714
    %1739 = vmatprep.subr.bf16.mxu0 0
    %1740 = vmatpush1.bf16.msra.mxu0 0
    %1741 = vmatprep.subr.bf16.mxu0 0
    %1742 = vmatpush1.bf16.msra.mxu0 0
    %1743 = vmatprep.subr.bf16.mxu0 0
    %1744 = vmatpush1.bf16.msra.mxu0 0
    %1745 = vmatprep.subr.bf16.mxu0 0
    %1746 = vmatpush1.bf16.msra.mxu0 0
    %1747 = vmatprep.subr.bf16.mxu0 0
    %1748 = vmatpush1.bf16.msra.mxu0 0
    %1749 = vmatprep.subr.bf16.mxu0 0
    %1750 = vmatpush1.bf16.msra.mxu0 0
    %1751 = vmatprep.subr.bf16.mxu0 0
    %1752 = vmatpush1.bf16.msra.mxu0 0
    %1753 = vmatprep.subr.bf16.mxu0 0
    %1754 = vmatpush1.bf16.msra.mxu0 0
    %1755 = vmatprep.mubr.bf16.mxu0 0
    %1756 = vmatmul.mubr.bf16.gmra.mrb[0].mxu0 %v1653
    %v1757 = vpop.f32.mrb[0].mxu0
    %v1758 = vadd.f32 %v1674, %v1757
    %v1759 = vpop.f32.mrb[0].mxu0
    %v1760 = vpop.f32.mrb[0].mxu0
    %v1761 = vpop.f32.mrb[0].mxu0
    %1762 = vdwg.mxu0
    %1763 = vst [vmem:[%s7] sm:$0xff] %v1758
    // Predicated region
    $region46: #{fwd.1} parent=1 // pred_check
      _
    $region47: #{fwd.1} parent=1 // pred_check_branch
      %1765 = sbr.rel (0) target = $region49
    $region48: #{fwd.1} parent=1 // pred_region
      _
    $region49: #{fwd.1} parent=1 // pred_fallthru
      _
    // Predicated region
    $region50: #{fwd.1} parent=1 // pred_check
      _
    $region51: #{fwd.1} parent=1 // pred_check_branch
      %1767 = sbr.rel (0) target = $region53
    $region52: #{fwd.1} parent=1 // pred_region
      _
    $region53: #{fwd.1} parent=1 // pred_fallthru
      _
    // Predicated region
    $region54: #{fwd.1} parent=1 // pred_check
      _
    $region55: #{fwd.1} parent=1 // pred_check_branch
      %1769 = sbr.rel (0) target = $region57
    $region56: #{fwd.1} parent=1 // pred_region
      _
    $region57: #{fwd.1} parent=1 // pred_fallthru
      _
    // Predicated region
    $region58: #{fwd.1} parent=1 // pred_check
      _
    $region59: #{fwd.1} parent=1 // pred_check_branch
      %1771 = sbr.rel (0) target = $region61
    $region60: #{fwd.1} parent=1 // pred_region
      _
    $region61: #{fwd.1} parent=1 // pred_fallthru
      _
    %1772 = vsyncpa [#allocation3], 1
    %1773 = vsyncpa [#allocation5], 1
    %1774 = vsyncpa [#allocation8], 1

</llo_original>
